<compile_context>
chip_gen: v6e
topology: v6e:2x2x1
jax: 0.10.0
libtpu: 0.0.40
codegen_flags: <defaults>
</compile_context>

<pallas_src>
import jax
import jax.numpy as jnp
from jax.experimental import pallas as pl
from jax.experimental.pallas import tpu as pltpu

# ---------------- config (stands in for `cfg`) ----------------
N_HARMONICS_XYZ = 6          # cfg.n_harmonic_functions_xyz
N_LAYERS_XYZ = 6             # cfg.n_layers_xyz
N_HIDDEN_XYZ = 128           # cfg.n_hidden_neurons_xyz (linear1 is 128 -> 4)
APPEND_XYZ = (3,)            # cfg.append_xyz (skip-connection layer indices)

EMB_SC = 3 * N_HARMONICS_XYZ                 # 18 sin features (and 18 cos)
EMB_SC_PAD = ((EMB_SC + 7) // 8) * 8         # 24: harmonic rows padded to x8
COORD_PAD = 8                                # xyz rows padded 3 -> 8
PE_PAD = 2 * EMB_SC_PAD + COORD_PAD + 8      # 64: packed embedding rows (4 bf16 vreg rows)


def _round_up(v, m):
    return ((v + m - 1) // m) * m


# ---------------- parameters (synthetic, deterministic) ----------------
def init_nerf_params(key):
    emb_dim = 2 * EMB_SC + 3  # 39 (include_input=True)
    freqs = 2.0 ** jnp.arange(N_HARMONICS_XYZ, dtype=jnp.float32)  # omega0=1, logspace
    layers = []
    keys = jax.random.split(key, N_LAYERS_XYZ + 1)
    for li in range(N_LAYERS_XYZ):
        if li == 0:
            din = emb_dim
        elif li in APPEND_XYZ:
            din = N_HIDDEN_XYZ + emb_dim
        else:
            din = N_HIDDEN_XYZ
        kw, kb = jax.random.split(keys[li])
        bound = 1.0 / (din ** 0.5)
        W = jax.random.uniform(kw, (N_HIDDEN_XYZ, din), jnp.float32, -bound, bound)
        b = jax.random.uniform(kb, (N_HIDDEN_XYZ,), jnp.float32, -bound, bound)
        layers.append((W, b))
    kw, kb = jax.random.split(keys[-1])
    bound = 1.0 / (N_HIDDEN_XYZ ** 0.5)
    W1 = jax.random.uniform(kw, (4, N_HIDDEN_XYZ), jnp.float32, -bound, bound)
    b1 = jax.random.uniform(kb, (4,), jnp.float32, -bound, bound)
    return {"freqs": freqs, "layers": layers, "W1": W1, "b1": b1}


# ---------------- weight packing ----------------
def _pack_kernel_weights(params):
    """Rearrange / zero-pad PyTorch-layout weights into MXU-friendly operands.

    Layer-0 and skip-layer weight columns are permuted to match the packed
    embedding row layout [sin(24); cos(24); xyz(8); 0(8)] so each of those
    layers is a single matmul.  Zero padding keeps the math identical.
    Weights are stored as bf16 (MXU operands); biases stay f32."""
    H = N_HIDDEN_XYZ
    sc = EMB_SC

    def pe_cols(Wsin, Wcos, Wxyz):
        out = jnp.zeros((H, PE_PAD), jnp.float32)
        out = out.at[:, :sc].set(Wsin)
        out = out.at[:, EMB_SC_PAD:EMB_SC_PAD + sc].set(Wcos)
        out = out.at[:, 2 * EMB_SC_PAD:2 * EMB_SC_PAD + 3].set(Wxyz)
        return out

    flat = []
    for li, (W, b) in enumerate(params["layers"]):
        b2 = b.reshape(H, 1).astype(jnp.float32)
        if li == 0:
            Wp = pe_cols(W[:, :sc], W[:, sc:2 * sc], W[:, 2 * sc:])          # (128, 64)
        elif li in APPEND_XYZ:
            Wp = jnp.concatenate(
                [W[:, :H],
                 pe_cols(W[:, H:H + sc], W[:, H + sc:H + 2 * sc], W[:, H + 2 * sc:])],
                axis=1)                                                      # (128, 192)
        else:
            Wp = W                                                           # (128, 128)
        flat += [Wp.astype(jnp.bfloat16), b2]

    W1p = jnp.zeros((8, H), jnp.float32).at[:4, :].set(params["W1"])
    b1p = jnp.zeros((8, 1), jnp.float32).at[:4, 0].set(params["b1"])
    flat += [W1p.astype(jnp.bfloat16), b1p]
    return flat


# ---------------- the fused kernel ----------------
def _make_nerf_kernel(n_layers, skips):
    skips = frozenset(skips)
    nh = N_HARMONICS_XYZ

    def kernel(pts_ref, freq_ref, *refs):
        out_ref = refs[-1]
        w = refs[:-1]

        def mm(a, b):
            # bf16 operands, f32 accumulation
            return jnp.dot(a, b, preferred_element_type=jnp.float32)

        x = pts_ref[...]                                   # (8, T) f32, xyz on sublanes
        t = x.shape[1]

        # Harmonic args via VPU broadcast multiply (no tiny K=8 matmul):
        # row r = c*nh + f  ->  x[c] * freqs[f]
        rep = jnp.concatenate(
            [jnp.broadcast_to(x[c:c + 1, :], (nh, t)) for c in range(3)]
            + [jnp.zeros((EMB_SC_PAD - 3 * nh, t), jnp.float32)], axis=0)    # (24, T)
        e = rep * freq_ref[...]                            # (24, T), rows >= 18 are 0

        # Packed embedding [sin(24); cos(24); xyz(8); 0(8)] -> (64, T) bf16
        # (computed once, reused at layer 0 and the skip layer).
        pe = jnp.concatenate(
            [jnp.sin(e), jnp.cos(e), x,
             jnp.zeros((PE_PAD - 2 * EMB_SC_PAD - COORD_PAD, t), jnp.float32)],
            axis=0).astype(jnp.bfloat16)

        h = None
        idx = 0
        for li in range(n_layers):
            if li == 0:
                pre = mm(w[idx][...], pe) + w[idx + 1][...]          # (128, T) f32
            elif li in skips:
                a = jnp.concatenate([h, pe], axis=0)                 # (192, T) bf16
                pre = mm(w[idx][...], a) + w[idx + 1][...]
            else:
                pre = mm(w[idx][...], h) + w[idx + 1][...]
            idx += 2
            h = jnp.maximum(pre, 0.0).astype(jnp.bfloat16)           # ReLU -> bf16

        o = mm(w[idx][...], h) + w[idx + 1][...]                     # (8, T) f32, rows>=4 unused
        o4 = o[0:4, :]
        row = jax.lax.broadcasted_iota(jnp.int32, (4, t), 0)
        dens = jnp.maximum(o4, 0.0)                                  # density = relu(row 0)
        sig = pl.reciprocal(1.0 + jnp.exp(-o4), approx=True)         # sigmoid (EUP recip)
        out_ref[...] = jnp.where(row == 0, dens, sig)                # single fused output

    return kernel


# ---------------- wrapper ----------------
def nerf_forward(sample_points, params, *, max_tile_n=4096):
    pts = sample_points.reshape(-1, 3).astype(jnp.float32)
    n = pts.shape[0]

    # Lane-dense tile (multiple of 128); keep grid >= 2 (and even when cheap)
    # so the single "parallel" axis shards across v7x's two TensorCores.
    n128 = _round_up(max(n, 1), 128)
    tile = min(max_tile_n, max(128, (n128 // 2 // 128) * 128))
    grid_n = pl.cdiv(n128, tile)
    if grid_n > 2 and grid_n % 2 == 1:
        grid_n += 1
        tile = max(128, _round_up(pl.cdiv(n128, grid_n), 128))
        grid_n = pl.cdiv(n128, tile)
    n_pad = grid_n * tile

    # Coords-major input: (8, N_pad), zero-padded; ~32 B/point of plumbing.
    pts_p = jnp.zeros((n_pad, COORD_PAD), jnp.float32).at[:n, :3].set(pts)
    pts_t = pts_p.T                                                  # (8, n_pad)

    freqs = params["freqs"].astype(jnp.float32)
    freq_col = jnp.zeros((EMB_SC_PAD, 1), jnp.float32).at[:EMB_SC, 0].set(
        jnp.tile(freqs, 3))                                          # (24, 1)

    flat_w = _pack_kernel_weights(params)
    kernel = _make_nerf_kernel(N_LAYERS_XYZ, APPEND_XYZ)

    def full_block(arr):
        # constant index_map -> block stays resident in VMEM across the grid
        return pl.BlockSpec(arr.shape, lambda i: (0, 0))

    weight_bytes = sum(int(a.size) * a.dtype.itemsize for a in flat_w)
    weight_bytes += int(freq_col.size) * 4
    flops_per_pt = 2 * (PE_PAD * 128 + 4 * 128 * 128 + (128 + PE_PAD) * 128 + 128 * 8)
    cost = pl.CostEstimate(
        flops=int(n_pad) * flops_per_pt,
        transcendentals=int(n_pad) * (2 * EMB_SC_PAD + 8),
        bytes_accessed=int(n_pad) * (COORD_PAD * 4 + 4 * 4) + weight_bytes)

    out4 = pl.pallas_call(
        kernel,
        out_shape=jax.ShapeDtypeStruct((4, n_pad), jnp.float32),
        grid_spec=pltpu.PrefetchScalarGridSpec(
            num_scalar_prefetch=0,
            grid=(grid_n,),
            in_specs=[pl.BlockSpec((COORD_PAD, tile), lambda i: (0, i)),
                      full_block(freq_col)]
                     + [full_block(w) for w in flat_w],
            out_specs=pl.BlockSpec((4, tile), lambda i: (0, i)),
        ),
        compiler_params=pltpu.CompilerParams(
            dimension_semantics=("parallel",),
            vmem_limit_bytes=32 * 1024 * 1024),
        cost_estimate=cost,
    )(pts_t, freq_col, *flat_w)

    return {"density": out4[0, :n],         # (N,)
            "feature": out4[1:4, :n].T}     # (N, 3)


# ---------------- pure-JAX reference (mirrors the PyTorch module) ----------------
def nerf_reference(sample_points, params):
    freqs = params["freqs"]
    pts = sample_points.reshape(-1, 3).astype(jnp.float32)
    emb = (pts[..., None] * freqs).reshape(pts.shape[0], -1)          # (N, 18)
    pe = jnp.concatenate([jnp.sin(emb), jnp.cos(emb), pts], axis=-1)  # (N, 39)
    hp = jax.lax.Precision.HIGHEST
    y = pe
    for li, (W, b) in enumerate(params["layers"]):
        if li in APPEND_XYZ:
            y = jnp.concatenate([y, pe], axis=-1)
        y = jnp.maximum(jnp.dot(y, W.T, precision=hp) + b, 0.0)
    out = jnp.dot(y, params["W1"].T, precision=hp) + params["b1"]
    return {"density": jnp.maximum(out[:, 0], 0.0),
            "feature": jax.nn.sigmoid(out[:, 1:])}


if __name__ == "__main__":
    key = jax.random.PRNGKey(0)
    pkey, dkey = jax.random.split(key)
    params = init_nerf_params(pkey)

    # Small "ray bundle": batch=2, rays=16, samples_per_ray=8 -> N = 256 points.
    sample_points = jax.random.normal(dkey, (2, 16, 8, 3), dtype=jnp.float32)

    out = nerf_forward(sample_points, params)
    out = jax.block_until_ready(out)

    ref = nerf_reference(sample_points, params)
    n = 2 * 16 * 8
    assert out["density"].shape == (n,)
    assert out["feature"].shape == (n, 3)
    d_err = float(jnp.max(jnp.abs(out["density"] - ref["density"])))
    f_err = float(jnp.max(jnp.abs(out["feature"] - ref["feature"])))
    # bf16 MXU operands (f32 accumulation) vs. f32 HIGHEST-precision reference.
    assert jnp.allclose(out["density"], ref["density"], atol=2e-2, rtol=2e-2), d_err
    assert jnp.allclose(out["feature"], ref["feature"], atol=2e-2, rtol=2e-2), f_err

    print("KERNEL_OK")
</pallas_src>

<mosaic_0001>
module attributes {stable_mosaic.version = 11 : i64} {
  func.func @kernel(%arg0: i32, %arg1: memref<8x128xf32, #tpu.memory_space<vmem>>, %arg2: memref<24x1xf32, #tpu.memory_space<vmem>>, %arg3: memref<128x64xbf16, #tpu.memory_space<vmem>>, %arg4: memref<128x1xf32, #tpu.memory_space<vmem>>, %arg5: memref<128x128xbf16, #tpu.memory_space<vmem>>, %arg6: memref<128x1xf32, #tpu.memory_space<vmem>>, %arg7: memref<128x128xbf16, #tpu.memory_space<vmem>>, %arg8: memref<128x1xf32, #tpu.memory_space<vmem>>, %arg9: memref<128x192xbf16, #tpu.memory_space<vmem>>, %arg10: memref<128x1xf32, #tpu.memory_space<vmem>>, %arg11: memref<128x128xbf16, #tpu.memory_space<vmem>>, %arg12: memref<128x1xf32, #tpu.memory_space<vmem>>, %arg13: memref<128x128xbf16, #tpu.memory_space<vmem>>, %arg14: memref<128x1xf32, #tpu.memory_space<vmem>>, %arg15: memref<8x128xbf16, #tpu.memory_space<vmem>>, %arg16: memref<8x1xf32, #tpu.memory_space<vmem>>, %arg17: memref<4x128xf32, #tpu.memory_space<vmem>>) attributes {dimension_semantics = [#tpu.dimension_semantics<parallel>], iteration_bounds = array<i64: 2>, scalar_prefetch = 0 : i64, scratch_operands = 0 : i64, tpu.core_type = #tpu.core_type<tc>, window_params = [{transform_indices = @transform_0, window_bounds = array<i64: 8, 128>}, {pipeline_mode = #tpu.pipeline_mode<synchronous>, transform_indices = @transform_1, window_bounds = array<i64: 24, 1>}, {pipeline_mode = #tpu.pipeline_mode<synchronous>, transform_indices = @transform_2, window_bounds = array<i64: 128, 64>}, {pipeline_mode = #tpu.pipeline_mode<synchronous>, transform_indices = @transform_3, window_bounds = array<i64: 128, 1>}, {pipeline_mode = #tpu.pipeline_mode<synchronous>, transform_indices = @transform_4, window_bounds = array<i64: 128, 128>}, {pipeline_mode = #tpu.pipeline_mode<synchronous>, transform_indices = @transform_5, window_bounds = array<i64: 128, 1>}, {pipeline_mode = #tpu.pipeline_mode<synchronous>, transform_indices = @transform_6, window_bounds = array<i64: 128, 128>}, {pipeline_mode = #tpu.pipeline_mode<synchronous>, transform_indices = @transform_7, window_bounds = array<i64: 128, 1>}, {pipeline_mode = #tpu.pipeline_mode<synchronous>, transform_indices = @transform_8, window_bounds = array<i64: 128, 192>}, {pipeline_mode = #tpu.pipeline_mode<synchronous>, transform_indices = @transform_9, window_bounds = array<i64: 128, 1>}, {pipeline_mode = #tpu.pipeline_mode<synchronous>, transform_indices = @transform_10, window_bounds = array<i64: 128, 128>}, {pipeline_mode = #tpu.pipeline_mode<synchronous>, transform_indices = @transform_11, window_bounds = array<i64: 128, 1>}, {pipeline_mode = #tpu.pipeline_mode<synchronous>, transform_indices = @transform_12, window_bounds = array<i64: 128, 128>}, {pipeline_mode = #tpu.pipeline_mode<synchronous>, transform_indices = @transform_13, window_bounds = array<i64: 128, 1>}, {pipeline_mode = #tpu.pipeline_mode<synchronous>, transform_indices = @transform_14, window_bounds = array<i64: 8, 128>}, {pipeline_mode = #tpu.pipeline_mode<synchronous>, transform_indices = @transform_15, window_bounds = array<i64: 8, 1>}, {transform_indices = @transform_16, window_bounds = array<i64: 4, 128>}]} {
    %c0 = arith.constant 0 : index
    %c0_0 = arith.constant 0 : index
    %0 = vector.load %arg1[%c0, %c0_0] : memref<8x128xf32, #tpu.memory_space<vmem>>, vector<8x128xf32>
    %1 = vector.extract_strided_slice %0 {offsets = [0, 0], sizes = [1, 128], strides = [1, 1]} : vector<8x128xf32> to vector<1x128xf32>
    %2 = vector.shape_cast %1 : vector<1x128xf32> to vector<1x128xf32>
    %3 = vector.broadcast %2 : vector<1x128xf32> to vector<6x128xf32>
    %4 = vector.extract_strided_slice %0 {offsets = [1, 0], sizes = [1, 128], strides = [1, 1]} : vector<8x128xf32> to vector<1x128xf32>
    %5 = vector.shape_cast %4 : vector<1x128xf32> to vector<1x128xf32>
    %6 = vector.broadcast %5 : vector<1x128xf32> to vector<6x128xf32>
    %7 = vector.extract_strided_slice %0 {offsets = [2, 0], sizes = [1, 128], strides = [1, 1]} : vector<8x128xf32> to vector<1x128xf32>
    %8 = vector.shape_cast %7 : vector<1x128xf32> to vector<1x128xf32>
    %9 = vector.broadcast %8 : vector<1x128xf32> to vector<6x128xf32>
    %cst = arith.constant 0.000000e+00 : f32
    %10 = vector.broadcast %cst : f32 to vector<6x128xf32>
    %11 = tpu.concatenate %3, %6, %9, %10 in 0 : vector<6x128xf32>, vector<6x128xf32>, vector<6x128xf32>, vector<6x128xf32> -> vector<24x128xf32>
    %c0_1 = arith.constant 0 : index
    %c0_2 = arith.constant 0 : index
    %12 = vector.load %arg2[%c0_1, %c0_2] : memref<24x1xf32, #tpu.memory_space<vmem>>, vector<24x1xf32>
    %13 = vector.broadcast %12 : vector<24x1xf32> to vector<24x128xf32>
    %14 = arith.mulf %11, %13 : vector<24x128xf32>
    %15 = math.sin %14 : vector<24x128xf32>
    %16 = math.cos %14 : vector<24x128xf32>
    %cst_3 = arith.constant 0.000000e+00 : f32
    %17 = vector.broadcast %cst_3 : f32 to vector<8x128xf32>
    %18 = tpu.concatenate %15, %16, %0, %17 in 0 : vector<24x128xf32>, vector<24x128xf32>, vector<8x128xf32>, vector<8x128xf32> -> vector<64x128xf32>
    %19 = arith.truncf %18 : vector<64x128xf32> to vector<64x128xbf16>
    %c0_4 = arith.constant 0 : index
    %c0_5 = arith.constant 0 : index
    %20 = vector.load %arg3[%c0_4, %c0_5] : memref<128x64xbf16, #tpu.memory_space<vmem>>, vector<128x64xbf16>
    %cst_6 = arith.constant dense<0.000000e+00> : vector<128x128xf32>
    %21 = tpu.matmul %20, %19, %cst_6 {dimension_numbers = #tpu.dot_dimension_numbers<[1], [0], [0], [1], [0, 0, 1, 1], [], []>} : vector<128x64xbf16>, vector<64x128xbf16>, vector<128x128xf32> -> vector<128x128xf32>
    %c0_7 = arith.constant 0 : index
    %c0_8 = arith.constant 0 : index
    %22 = vector.load %arg4[%c0_7, %c0_8] : memref<128x1xf32, #tpu.memory_space<vmem>>, vector<128x1xf32>
    %23 = vector.broadcast %22 : vector<128x1xf32> to vector<128x128xf32>
    %24 = arith.addf %21, %23 : vector<128x128xf32>
    %cst_9 = arith.constant 0.000000e+00 : f32
    %25 = vector.broadcast %cst_9 : f32 to vector<128x128xf32>
    %26 = arith.maximumf %24, %25 : vector<128x128xf32>
    %27 = arith.truncf %26 : vector<128x128xf32> to vector<128x128xbf16>
    %c0_10 = arith.constant 0 : index
    %c0_11 = arith.constant 0 : index
    %28 = vector.load %arg5[%c0_10, %c0_11] : memref<128x128xbf16, #tpu.memory_space<vmem>>, vector<128x128xbf16>
    %cst_12 = arith.constant dense<0.000000e+00> : vector<128x128xf32>
    %29 = tpu.matmul %28, %27, %cst_12 {dimension_numbers = #tpu.dot_dimension_numbers<[1], [0], [0], [1], [0, 0, 1, 1], [], []>} : vector<128x128xbf16>, vector<128x128xbf16>, vector<128x128xf32> -> vector<128x128xf32>
    %c0_13 = arith.constant 0 : index
    %c0_14 = arith.constant 0 : index
    %30 = vector.load %arg6[%c0_13, %c0_14] : memref<128x1xf32, #tpu.memory_space<vmem>>, vector<128x1xf32>
    %31 = vector.broadcast %30 : vector<128x1xf32> to vector<128x128xf32>
    %32 = arith.addf %29, %31 : vector<128x128xf32>
    %cst_15 = arith.constant 0.000000e+00 : f32
    %33 = vector.broadcast %cst_15 : f32 to vector<128x128xf32>
    %34 = arith.maximumf %32, %33 : vector<128x128xf32>
    %35 = arith.truncf %34 : vector<128x128xf32> to vector<128x128xbf16>
    %c0_16 = arith.constant 0 : index
    %c0_17 = arith.constant 0 : index
    %36 = vector.load %arg7[%c0_16, %c0_17] : memref<128x128xbf16, #tpu.memory_space<vmem>>, vector<128x128xbf16>
    %cst_18 = arith.constant dense<0.000000e+00> : vector<128x128xf32>
    %37 = tpu.matmul %36, %35, %cst_18 {dimension_numbers = #tpu.dot_dimension_numbers<[1], [0], [0], [1], [0, 0, 1, 1], [], []>} : vector<128x128xbf16>, vector<128x128xbf16>, vector<128x128xf32> -> vector<128x128xf32>
    %c0_19 = arith.constant 0 : index
    %c0_20 = arith.constant 0 : index
    %38 = vector.load %arg8[%c0_19, %c0_20] : memref<128x1xf32, #tpu.memory_space<vmem>>, vector<128x1xf32>
    %39 = vector.broadcast %38 : vector<128x1xf32> to vector<128x128xf32>
    %40 = arith.addf %37, %39 : vector<128x128xf32>
    %cst_21 = arith.constant 0.000000e+00 : f32
    %41 = vector.broadcast %cst_21 : f32 to vector<128x128xf32>
    %42 = arith.maximumf %40, %41 : vector<128x128xf32>
    %43 = arith.truncf %42 : vector<128x128xf32> to vector<128x128xbf16>
    %44 = tpu.concatenate %43, %19 in 0 : vector<128x128xbf16>, vector<64x128xbf16> -> vector<192x128xbf16>
    %c0_22 = arith.constant 0 : index
    %c0_23 = arith.constant 0 : index
    %45 = vector.load %arg9[%c0_22, %c0_23] : memref<128x192xbf16, #tpu.memory_space<vmem>>, vector<128x192xbf16>
    %cst_24 = arith.constant dense<0.000000e+00> : vector<128x128xf32>
    %46 = tpu.matmul %45, %44, %cst_24 {dimension_numbers = #tpu.dot_dimension_numbers<[1], [0], [0], [1], [0, 0, 1, 1], [], []>} : vector<128x192xbf16>, vector<192x128xbf16>, vector<128x128xf32> -> vector<128x128xf32>
    %c0_25 = arith.constant 0 : index
    %c0_26 = arith.constant 0 : index
    %47 = vector.load %arg10[%c0_25, %c0_26] : memref<128x1xf32, #tpu.memory_space<vmem>>, vector<128x1xf32>
    %48 = vector.broadcast %47 : vector<128x1xf32> to vector<128x128xf32>
    %49 = arith.addf %46, %48 : vector<128x128xf32>
    %cst_27 = arith.constant 0.000000e+00 : f32
    %50 = vector.broadcast %cst_27 : f32 to vector<128x128xf32>
    %51 = arith.maximumf %49, %50 : vector<128x128xf32>
    %52 = arith.truncf %51 : vector<128x128xf32> to vector<128x128xbf16>
    %c0_28 = arith.constant 0 : index
    %c0_29 = arith.constant 0 : index
    %53 = vector.load %arg11[%c0_28, %c0_29] : memref<128x128xbf16, #tpu.memory_space<vmem>>, vector<128x128xbf16>
    %cst_30 = arith.constant dense<0.000000e+00> : vector<128x128xf32>
    %54 = tpu.matmul %53, %52, %cst_30 {dimension_numbers = #tpu.dot_dimension_numbers<[1], [0], [0], [1], [0, 0, 1, 1], [], []>} : vector<128x128xbf16>, vector<128x128xbf16>, vector<128x128xf32> -> vector<128x128xf32>
    %c0_31 = arith.constant 0 : index
    %c0_32 = arith.constant 0 : index
    %55 = vector.load %arg12[%c0_31, %c0_32] : memref<128x1xf32, #tpu.memory_space<vmem>>, vector<128x1xf32>
    %56 = vector.broadcast %55 : vector<128x1xf32> to vector<128x128xf32>
    %57 = arith.addf %54, %56 : vector<128x128xf32>
    %cst_33 = arith.constant 0.000000e+00 : f32
    %58 = vector.broadcast %cst_33 : f32 to vector<128x128xf32>
    %59 = arith.maximumf %57, %58 : vector<128x128xf32>
    %60 = arith.truncf %59 : vector<128x128xf32> to vector<128x128xbf16>
    %c0_34 = arith.constant 0 : index
    %c0_35 = arith.constant 0 : index
    %61 = vector.load %arg13[%c0_34, %c0_35] : memref<128x128xbf16, #tpu.memory_space<vmem>>, vector<128x128xbf16>
    %cst_36 = arith.constant dense<0.000000e+00> : vector<128x128xf32>
    %62 = tpu.matmul %61, %60, %cst_36 {dimension_numbers = #tpu.dot_dimension_numbers<[1], [0], [0], [1], [0, 0, 1, 1], [], []>} : vector<128x128xbf16>, vector<128x128xbf16>, vector<128x128xf32> -> vector<128x128xf32>
    %c0_37 = arith.constant 0 : index
    %c0_38 = arith.constant 0 : index
    %63 = vector.load %arg14[%c0_37, %c0_38] : memref<128x1xf32, #tpu.memory_space<vmem>>, vector<128x1xf32>
    %64 = vector.broadcast %63 : vector<128x1xf32> to vector<128x128xf32>
    %65 = arith.addf %62, %64 : vector<128x128xf32>
    %cst_39 = arith.constant 0.000000e+00 : f32
    %66 = vector.broadcast %cst_39 : f32 to vector<128x128xf32>
    %67 = arith.maximumf %65, %66 : vector<128x128xf32>
    %68 = arith.truncf %67 : vector<128x128xf32> to vector<128x128xbf16>
    %c0_40 = arith.constant 0 : index
    %c0_41 = arith.constant 0 : index
    %69 = vector.load %arg15[%c0_40, %c0_41] : memref<8x128xbf16, #tpu.memory_space<vmem>>, vector<8x128xbf16>
    %cst_42 = arith.constant dense<0.000000e+00> : vector<8x128xf32>
    %70 = tpu.matmul %69, %68, %cst_42 {dimension_numbers = #tpu.dot_dimension_numbers<[1], [0], [0], [1], [0, 0, 1, 1], [], []>} : vector<8x128xbf16>, vector<128x128xbf16>, vector<8x128xf32> -> vector<8x128xf32>
    %c0_43 = arith.constant 0 : index
    %c0_44 = arith.constant 0 : index
    %71 = vector.load %arg16[%c0_43, %c0_44] : memref<8x1xf32, #tpu.memory_space<vmem>>, vector<8x1xf32>
    %72 = vector.broadcast %71 : vector<8x1xf32> to vector<8x128xf32>
    %73 = arith.addf %70, %72 : vector<8x128xf32>
    %74 = vector.extract_strided_slice %73 {offsets = [0, 0], sizes = [4, 128], strides = [1, 1]} : vector<8x128xf32> to vector<4x128xf32>
    %75 = tpu.iota {dimensions = array<i32: 0>} : vector<4x128xi32>
    %cst_45 = arith.constant 0.000000e+00 : f32
    %76 = vector.broadcast %cst_45 : f32 to vector<4x128xf32>
    %77 = arith.maximumf %74, %76 : vector<4x128xf32>
    %cst_46 = arith.constant 0.000000e+00 : f32
    %78 = vector.broadcast %cst_46 : f32 to vector<4x128xf32>
    %79 = arith.subf %78, %74 : vector<4x128xf32>
    %80 = math.exp %79 : vector<4x128xf32>
    %cst_47 = arith.constant 1.000000e+00 : f32
    %81 = vector.broadcast %cst_47 : f32 to vector<4x128xf32>
    %82 = arith.addf %81, %80 : vector<4x128xf32>
    %83 = tpu.reciprocal %82 {approx = true} : vector<4x128xf32> -> vector<4x128xf32>
    %c0_i32 = arith.constant 0 : i32
    %84 = vector.broadcast %c0_i32 : i32 to vector<4x128xi32>
    %85 = arith.cmpi eq, %75, %84 : vector<4x128xi32>
    %86 = arith.select %85, %77, %83 : vector<4x128xi1>, vector<4x128xf32>
    %c0_48 = arith.constant 0 : index
    %c0_49 = arith.constant 0 : index
    %87 = vector.load %arg17[%c0_48, %c0_49] : memref<4x128xf32, #tpu.memory_space<vmem>>, vector<4x128xf32>
    tpu.vector_store %arg17[%c0_48, %c0_49], %86 {strides = array<i32>} : memref<4x128xf32, #tpu.memory_space<vmem>>, vector<4x128xf32>,
    return
  }
  func.func @transform_0(%arg0: i32) -> (i32, i32) {
    %c0_i32 = arith.constant 0 : i32
    %c0_i32_0 = arith.constant 0 : i32
    return %c0_i32, %arg0 : i32, i32
  }
  func.func @transform_1(%arg0: i32) -> (i32, i32) {
    %c0_i32 = arith.constant 0 : i32
    %c0_i32_0 = arith.constant 0 : i32
    %c0_i32_1 = arith.constant 0 : i32
    return %c0_i32, %c0_i32_0 : i32, i32
  }
  func.func @transform_2(%arg0: i32) -> (i32, i32) {
    %c0_i32 = arith.constant 0 : i32
    %c0_i32_0 = arith.constant 0 : i32
    %c0_i32_1 = arith.constant 0 : i32
    return %c0_i32, %c0_i32_0 : i32, i32
  }
  func.func @transform_3(%arg0: i32) -> (i32, i32) {
    %c0_i32 = arith.constant 0 : i32
    %c0_i32_0 = arith.constant 0 : i32
    %c0_i32_1 = arith.constant 0 : i32
    return %c0_i32, %c0_i32_0 : i32, i32
  }
  func.func @transform_4(%arg0: i32) -> (i32, i32) {
    %c0_i32 = arith.constant 0 : i32
    %c0_i32_0 = arith.constant 0 : i32
    %c0_i32_1 = arith.constant 0 : i32
    return %c0_i32, %c0_i32_0 : i32, i32
  }
  func.func @transform_5(%arg0: i32) -> (i32, i32) {
    %c0_i32 = arith.constant 0 : i32
    %c0_i32_0 = arith.constant 0 : i32
    %c0_i32_1 = arith.constant 0 : i32
    return %c0_i32, %c0_i32_0 : i32, i32
  }
  func.func @transform_6(%arg0: i32) -> (i32, i32) {
    %c0_i32 = arith.constant 0 : i32
    %c0_i32_0 = arith.constant 0 : i32
    %c0_i32_1 = arith.constant 0 : i32
    return %c0_i32, %c0_i32_0 : i32, i32
  }
  func.func @transform_7(%arg0: i32) -> (i32, i32) {
    %c0_i32 = arith.constant 0 : i32
    %c0_i32_0 = arith.constant 0 : i32
    %c0_i32_1 = arith.constant 0 : i32
    return %c0_i32, %c0_i32_0 : i32, i32
  }
  func.func @transform_8(%arg0: i32) -> (i32, i32) {
    %c0_i32 = arith.constant 0 : i32
    %c0_i32_0 = arith.constant 0 : i32
    %c0_i32_1 = arith.constant 0 : i32
    return %c0_i32, %c0_i32_0 : i32, i32
  }
  func.func @transform_9(%arg0: i32) -> (i32, i32) {
    %c0_i32 = arith.constant 0 : i32
    %c0_i32_0 = arith.constant 0 : i32
    %c0_i32_1 = arith.constant 0 : i32
    return %c0_i32, %c0_i32_0 : i32, i32
  }
  func.func @transform_10(%arg0: i32) -> (i32, i32) {
    %c0_i32 = arith.constant 0 : i32
    %c0_i32_0 = arith.constant 0 : i32
    %c0_i32_1 = arith.constant 0 : i32
    return %c0_i32, %c0_i32_0 : i32, i32
  }
  func.func @transform_11(%arg0: i32) -> (i32, i32) {
    %c0_i32 = arith.constant 0 : i32
    %c0_i32_0 = arith.constant 0 : i32
    %c0_i32_1 = arith.constant 0 : i32
    return %c0_i32, %c0_i32_0 : i32, i32
  }
  func.func @transform_12(%arg0: i32) -> (i32, i32) {
    %c0_i32 = arith.constant 0 : i32
    %c0_i32_0 = arith.constant 0 : i32
    %c0_i32_1 = arith.constant 0 : i32
    return %c0_i32, %c0_i32_0 : i32, i32
  }
  func.func @transform_13(%arg0: i32) -> (i32, i32) {
    %c0_i32 = arith.constant 0 : i32
    %c0_i32_0 = arith.constant 0 : i32
    %c0_i32_1 = arith.constant 0 : i32
    return %c0_i32, %c0_i32_0 : i32, i32
  }
  func.func @transform_14(%arg0: i32) -> (i32, i32) {
    %c0_i32 = arith.constant 0 : i32
    %c0_i32_0 = arith.constant 0 : i32
    %c0_i32_1 = arith.constant 0 : i32
    return %c0_i32, %c0_i32_0 : i32, i32
  }
  func.func @transform_15(%arg0: i32) -> (i32, i32) {
    %c0_i32 = arith.constant 0 : i32
    %c0_i32_0 = arith.constant 0 : i32
    %c0_i32_1 = arith.constant 0 : i32
    return %c0_i32, %c0_i32_0 : i32, i32
  }
  func.func @transform_16(%arg0: i32) -> (i32, i32) {
    %c0_i32 = arith.constant 0 : i32
    %c0_i32_0 = arith.constant 0 : i32
    return %c0_i32, %arg0 : i32, i32
  }
}

</mosaic_0001>

<llo_original>
// kernel: tpu_custom_call.1
$region0: #{tpu_custom_call.1}
  #allocation0 [shape = 'u32[]', space=smem, size = 0x4, offset = 0x4, fixed_abs, tag = 'smem constant byte address 0x4 - core index']
  #allocation1 [shape = 'u32[144,128]{1,0:T(1,128)}', space=vmem, size = 0x12000, scoped, tag = 'internal scratch']
  %s0 = inlined_call_operand.vmem [shape: f32[8,256], index: 0, kind: input, shape index: {}]
  %s1 = inlined_call_operand.vmem [shape: f32[24,1], index: 1, kind: input, shape index: {}]
  %s2 = inlined_call_operand.vmem [shape: bf16[128,64], index: 2, kind: input, shape index: {}]
  %s3 = inlined_call_operand.vmem [shape: f32[128,1], index: 3, kind: input, shape index: {}]
  %s4 = inlined_call_operand.vmem [shape: bf16[128,128], index: 4, kind: input, shape index: {}]
  %s5 = inlined_call_operand.vmem [shape: f32[128,1], index: 5, kind: input, shape index: {}]
  %s6 = inlined_call_operand.vmem [shape: bf16[128,128], index: 6, kind: input, shape index: {}]
  %s7 = inlined_call_operand.vmem [shape: f32[128,1], index: 7, kind: input, shape index: {}]
  %s8 = inlined_call_operand.vmem [shape: bf16[128,192], index: 8, kind: input, shape index: {}]
  %s9 = inlined_call_operand.vmem [shape: f32[128,1], index: 9, kind: input, shape index: {}]
  %s10 = inlined_call_operand.vmem [shape: bf16[128,128], index: 10, kind: input, shape index: {}]
  %s11 = inlined_call_operand.vmem [shape: f32[128,1], index: 11, kind: input, shape index: {}]
  %s12 = inlined_call_operand.vmem [shape: bf16[128,128], index: 12, kind: input, shape index: {}]
  %s13 = inlined_call_operand.vmem [shape: f32[128,1], index: 13, kind: input, shape index: {}]
  %s14 = inlined_call_operand.vmem [shape: bf16[8,128], index: 14, kind: input, shape index: {}]
  %s15 = inlined_call_operand.vmem [shape: f32[8,1], index: 15, kind: input, shape index: {}]
  %s16 = inlined_call_operand.hbm [shape: f32[4,256], index: 16, kind: output, shape index: {}]
  %s17 = sld [smem:[#allocation0]]
  $region97: #{tpu_custom_call.1} parent=0
    _
  %s19 = ssub.s32 1, %s17
  %s20 = scalar_select 0, %s19, %s17
  $region1: #{tpu_custom_call.1} parent=0
    #allocation2 [shape = 'u8[4096]{0}', space=vmem, size = 0x1000, scoped, tag = 'output window, operand 0']
    #allocation3 [shape = 's32[2]{0}', space=sflag, size = 0x8, scoped, tag = 'scoped memory for tpu_custom_call.1']
    %21 = vsyncpa [#allocation3], 0
    %s22 = scalar_lea.sflag [#allocation3], 1
    %23 = vsyncpa %s22, 0
    loop: start=0, step=1, limit=4
    $region2: #{tpu_custom_call.1} parent=1 // loop_pre_header
      _
    $region3: #{tpu_custom_call.1} parent=1 // loop_header
      %s25 = sphi 0, %s29
      %p26 = scmp.ge.s32.totalorder %s25, 4
      %s35 = sphi 0, %s37
      %s38 = sphi 0, %s35
      %s39 = sphi 0, %s38
      %s55 = sphi 0, %s39
      %s59 = sphi 0, %s59
      %s61 = sphi 0, %s59
      %s62 = sphi 0, %s61
      %s76 = sphi 0, %s62
      %s80 = sphi 0, %s80
      %s82 = sphi 0, %s80
      %s83 = sphi 0, %s82
      %s97 = sphi 0, %s83
      %s101 = sphi 0, %s101
      %s103 = sphi 0, %s101
      %s104 = sphi 0, %s103
      %s118 = sphi 0, %s104
      %s122 = sphi 0, %s122
      %s124 = sphi 0, %s122
      %s125 = sphi 0, %s124
      %s139 = sphi 0, %s125
      %s143 = sphi 0, %s143
      %s145 = sphi 0, %s143
      %s146 = sphi 0, %s145
      %s160 = sphi 0, %s146
      %s164 = sphi 0, %s164
      %s166 = sphi 0, %s164
      %s167 = sphi 0, %s166
      %s181 = sphi 0, %s167
      %s185 = sphi 0, %s185
      %s187 = sphi 0, %s185
      %s188 = sphi 0, %s187
      %s202 = sphi 0, %s188
      %s206 = sphi 0, %s206
      %s208 = sphi 0, %s206
      %s209 = sphi 0, %s208
      %s223 = sphi 0, %s209
      %s227 = sphi 0, %s227
      %s229 = sphi 0, %s227
      %s230 = sphi 0, %s229
      %s244 = sphi 0, %s230
      %s248 = sphi 0, %s248
      %s250 = sphi 0, %s248
      %s251 = sphi 0, %s250
      %s265 = sphi 0, %s251
      %s269 = sphi 0, %s269
      %s271 = sphi 0, %s269
      %s272 = sphi 0, %s271
      %s286 = sphi 0, %s272
      %s290 = sphi 0, %s290
      %s292 = sphi 0, %s290
      %s293 = sphi 0, %s292
      %s307 = sphi 0, %s293
      %s311 = sphi 0, %s311
      %s313 = sphi 0, %s311
      %s314 = sphi 0, %s313
      %s328 = sphi 0, %s314
      %s332 = sphi 0, %s332
      %s334 = sphi 0, %s332
      %s335 = sphi 0, %s334
      %s349 = sphi 0, %s335
      %s353 = sphi 0, %s353
      %s355 = sphi 0, %s353
      %s356 = sphi 0, %s355
      %s370 = sphi 0, %s356
      %s376 = sphi 0, %s378
      %s379 = sphi 0, %s376
      %s380 = sphi 0, %s379
      %s396 = sphi 0, %s380
    $region4: #{tpu_custom_call.1} parent=1 // loop_header_branch
      %28 = sbr.rel (%p26) target = $region8
    $region5: #{tpu_custom_call.1} parent=1 // loop_body
      %s30 = ssub.s32 %s25, 1
      %s31 = ssub.s32 %s25, 2
      %s32 = sadd.s32 %s25, 1
      %s33 = ssub.s32 %s25, %s32
      %p34 = scmp.eq.s32.totalorder %s33, 0
      %s36 = sadd.s32 %s35, 1
      %s37 = scalar_select %p34, %s35, %s36
      %p40 = pneg %p34
      %p41 = scmp.eq.s32.totalorder %s25, 1
      %p42 = por %p40, %p41
      %p43 = scmp.ne.s32.totalorder %s35, %s38
      %p44 = scmp.eq.s32.totalorder %s25, 0
      %p45 = por %p43, %p44
      %p46 = scmp.ne.s32.totalorder %s35, %s38
      %p47 = scmp.eq.s32.totalorder %s30, 1
      %p48 = por %p46, %p47
      %p49 = scmp.ne.s32.totalorder %s38, %s39
      %p50 = scmp.eq.s32.totalorder %s30, 0
      %p51 = por %p49, %p50
      %p52 = scmp.ne.s32.totalorder %s38, %s39
      %p53 = scmp.eq.s32.totalorder %s31, 1
      %p54 = por %p52, %p53
      %p56 = scmp.ne.s32.totalorder %s39, %s55
      %p57 = scmp.eq.s32.totalorder %s31, 0
      %p58 = por %p56, %p57
      %s60 = sadd.s32 %s59, 1
      %p63 = scmp.eq.s32.totalorder %s25, 1
      %p64 = scmp.ne.s32.totalorder %s59, %s61
      %p65 = scmp.eq.s32.totalorder %s25, 0
      %p66 = por %p64, %p65
      %p67 = scmp.ne.s32.totalorder %s59, %s61
      %p68 = scmp.eq.s32.totalorder %s30, 1
      %p69 = por %p67, %p68
      %p70 = scmp.ne.s32.totalorder %s61, %s62
      %p71 = scmp.eq.s32.totalorder %s30, 0
      %p72 = por %p70, %p71
      %p73 = scmp.ne.s32.totalorder %s61, %s62
      %p74 = scmp.eq.s32.totalorder %s31, 1
      %p75 = por %p73, %p74
      %p77 = scmp.ne.s32.totalorder %s62, %s76
      %p78 = scmp.eq.s32.totalorder %s31, 0
      %p79 = por %p77, %p78
      %s81 = sadd.s32 %s80, 1
      %p84 = scmp.eq.s32.totalorder %s25, 1
      %p85 = scmp.ne.s32.totalorder %s80, %s82
      %p86 = scmp.eq.s32.totalorder %s25, 0
      %p87 = por %p85, %p86
      %p88 = scmp.ne.s32.totalorder %s80, %s82
      %p89 = scmp.eq.s32.totalorder %s30, 1
      %p90 = por %p88, %p89
      %p91 = scmp.ne.s32.totalorder %s82, %s83
      %p92 = scmp.eq.s32.totalorder %s30, 0
      %p93 = por %p91, %p92
      %p94 = scmp.ne.s32.totalorder %s82, %s83
      %p95 = scmp.eq.s32.totalorder %s31, 1
      %p96 = por %p94, %p95
      %p98 = scmp.ne.s32.totalorder %s83, %s97
      %p99 = scmp.eq.s32.totalorder %s31, 0
      %p100 = por %p98, %p99
      %s102 = sadd.s32 %s101, 1
      %p105 = scmp.eq.s32.totalorder %s25, 1
      %p106 = scmp.ne.s32.totalorder %s101, %s103
      %p107 = scmp.eq.s32.totalorder %s25, 0
      %p108 = por %p106, %p107
      %p109 = scmp.ne.s32.totalorder %s101, %s103
      %p110 = scmp.eq.s32.totalorder %s30, 1
      %p111 = por %p109, %p110
      %p112 = scmp.ne.s32.totalorder %s103, %s104
      %p113 = scmp.eq.s32.totalorder %s30, 0
      %p114 = por %p112, %p113
      %p115 = scmp.ne.s32.totalorder %s103, %s104
      %p116 = scmp.eq.s32.totalorder %s31, 1
      %p117 = por %p115, %p116
      %p119 = scmp.ne.s32.totalorder %s104, %s118
      %p120 = scmp.eq.s32.totalorder %s31, 0
      %p121 = por %p119, %p120
      %s123 = sadd.s32 %s122, 1
      %p126 = scmp.eq.s32.totalorder %s25, 1
      %p127 = scmp.ne.s32.totalorder %s122, %s124
      %p128 = scmp.eq.s32.totalorder %s25, 0
      %p129 = por %p127, %p128
      %p130 = scmp.ne.s32.totalorder %s122, %s124
      %p131 = scmp.eq.s32.totalorder %s30, 1
      %p132 = por %p130, %p131
      %p133 = scmp.ne.s32.totalorder %s124, %s125
      %p134 = scmp.eq.s32.totalorder %s30, 0
      %p135 = por %p133, %p134
      %p136 = scmp.ne.s32.totalorder %s124, %s125
      %p137 = scmp.eq.s32.totalorder %s31, 1
      %p138 = por %p136, %p137
      %p140 = scmp.ne.s32.totalorder %s125, %s139
      %p141 = scmp.eq.s32.totalorder %s31, 0
      %p142 = por %p140, %p141
      %s144 = sadd.s32 %s143, 1
      %p147 = scmp.eq.s32.totalorder %s25, 1
      %p148 = scmp.ne.s32.totalorder %s143, %s145
      %p149 = scmp.eq.s32.totalorder %s25, 0
      %p150 = por %p148, %p149
      %p151 = scmp.ne.s32.totalorder %s143, %s145
      %p152 = scmp.eq.s32.totalorder %s30, 1
      %p153 = por %p151, %p152
      %p154 = scmp.ne.s32.totalorder %s145, %s146
      %p155 = scmp.eq.s32.totalorder %s30, 0
      %p156 = por %p154, %p155
      %p157 = scmp.ne.s32.totalorder %s145, %s146
      %p158 = scmp.eq.s32.totalorder %s31, 1
      %p159 = por %p157, %p158
      %p161 = scmp.ne.s32.totalorder %s146, %s160
      %p162 = scmp.eq.s32.totalorder %s31, 0
      %p163 = por %p161, %p162
      %s165 = sadd.s32 %s164, 1
      %p168 = scmp.eq.s32.totalorder %s25, 1
      %p169 = scmp.ne.s32.totalorder %s164, %s166
      %p170 = scmp.eq.s32.totalorder %s25, 0
      %p171 = por %p169, %p170
      %p172 = scmp.ne.s32.totalorder %s164, %s166
      %p173 = scmp.eq.s32.totalorder %s30, 1
      %p174 = por %p172, %p173
      %p175 = scmp.ne.s32.totalorder %s166, %s167
      %p176 = scmp.eq.s32.totalorder %s30, 0
      %p177 = por %p175, %p176
      %p178 = scmp.ne.s32.totalorder %s166, %s167
      %p179 = scmp.eq.s32.totalorder %s31, 1
      %p180 = por %p178, %p179
      %p182 = scmp.ne.s32.totalorder %s167, %s181
      %p183 = scmp.eq.s32.totalorder %s31, 0
      %p184 = por %p182, %p183
      %s186 = sadd.s32 %s185, 1
      %p189 = scmp.eq.s32.totalorder %s25, 1
      %p190 = scmp.ne.s32.totalorder %s185, %s187
      %p191 = scmp.eq.s32.totalorder %s25, 0
      %p192 = por %p190, %p191
      %p193 = scmp.ne.s32.totalorder %s185, %s187
      %p194 = scmp.eq.s32.totalorder %s30, 1
      %p195 = por %p193, %p194
      %p196 = scmp.ne.s32.totalorder %s187, %s188
      %p197 = scmp.eq.s32.totalorder %s30, 0
      %p198 = por %p196, %p197
      %p199 = scmp.ne.s32.totalorder %s187, %s188
      %p200 = scmp.eq.s32.totalorder %s31, 1
      %p201 = por %p199, %p200
      %p203 = scmp.ne.s32.totalorder %s188, %s202
      %p204 = scmp.eq.s32.totalorder %s31, 0
      %p205 = por %p203, %p204
      %s207 = sadd.s32 %s206, 1
      %p210 = scmp.eq.s32.totalorder %s25, 1
      %p211 = scmp.ne.s32.totalorder %s206, %s208
      %p212 = scmp.eq.s32.totalorder %s25, 0
      %p213 = por %p211, %p212
      %p214 = scmp.ne.s32.totalorder %s206, %s208
      %p215 = scmp.eq.s32.totalorder %s30, 1
      %p216 = por %p214, %p215
      %p217 = scmp.ne.s32.totalorder %s208, %s209
      %p218 = scmp.eq.s32.totalorder %s30, 0
      %p219 = por %p217, %p218
      %p220 = scmp.ne.s32.totalorder %s208, %s209
      %p221 = scmp.eq.s32.totalorder %s31, 1
      %p222 = por %p220, %p221
      %p224 = scmp.ne.s32.totalorder %s209, %s223
      %p225 = scmp.eq.s32.totalorder %s31, 0
      %p226 = por %p224, %p225
      %s228 = sadd.s32 %s227, 1
      %p231 = scmp.eq.s32.totalorder %s25, 1
      %p232 = scmp.ne.s32.totalorder %s227, %s229
      %p233 = scmp.eq.s32.totalorder %s25, 0
      %p234 = por %p232, %p233
      %p235 = scmp.ne.s32.totalorder %s227, %s229
      %p236 = scmp.eq.s32.totalorder %s30, 1
      %p237 = por %p235, %p236
      %p238 = scmp.ne.s32.totalorder %s229, %s230
      %p239 = scmp.eq.s32.totalorder %s30, 0
      %p240 = por %p238, %p239
      %p241 = scmp.ne.s32.totalorder %s229, %s230
      %p242 = scmp.eq.s32.totalorder %s31, 1
      %p243 = por %p241, %p242
      %p245 = scmp.ne.s32.totalorder %s230, %s244
      %p246 = scmp.eq.s32.totalorder %s31, 0
      %p247 = por %p245, %p246
      %s249 = sadd.s32 %s248, 1
      %p252 = scmp.eq.s32.totalorder %s25, 1
      %p253 = scmp.ne.s32.totalorder %s248, %s250
      %p254 = scmp.eq.s32.totalorder %s25, 0
      %p255 = por %p253, %p254
      %p256 = scmp.ne.s32.totalorder %s248, %s250
      %p257 = scmp.eq.s32.totalorder %s30, 1
      %p258 = por %p256, %p257
      %p259 = scmp.ne.s32.totalorder %s250, %s251
      %p260 = scmp.eq.s32.totalorder %s30, 0
      %p261 = por %p259, %p260
      %p262 = scmp.ne.s32.totalorder %s250, %s251
      %p263 = scmp.eq.s32.totalorder %s31, 1
      %p264 = por %p262, %p263
      %p266 = scmp.ne.s32.totalorder %s251, %s265
      %p267 = scmp.eq.s32.totalorder %s31, 0
      %p268 = por %p266, %p267
      %s270 = sadd.s32 %s269, 1
      %p273 = scmp.eq.s32.totalorder %s25, 1
      %p274 = scmp.ne.s32.totalorder %s269, %s271
      %p275 = scmp.eq.s32.totalorder %s25, 0
      %p276 = por %p274, %p275
      %p277 = scmp.ne.s32.totalorder %s269, %s271
      %p278 = scmp.eq.s32.totalorder %s30, 1
      %p279 = por %p277, %p278
      %p280 = scmp.ne.s32.totalorder %s271, %s272
      %p281 = scmp.eq.s32.totalorder %s30, 0
      %p282 = por %p280, %p281
      %p283 = scmp.ne.s32.totalorder %s271, %s272
      %p284 = scmp.eq.s32.totalorder %s31, 1
      %p285 = por %p283, %p284
      %p287 = scmp.ne.s32.totalorder %s272, %s286
      %p288 = scmp.eq.s32.totalorder %s31, 0
      %p289 = por %p287, %p288
      %s291 = sadd.s32 %s290, 1
      %p294 = scmp.eq.s32.totalorder %s25, 1
      %p295 = scmp.ne.s32.totalorder %s290, %s292
      %p296 = scmp.eq.s32.totalorder %s25, 0
      %p297 = por %p295, %p296
      %p298 = scmp.ne.s32.totalorder %s290, %s292
      %p299 = scmp.eq.s32.totalorder %s30, 1
      %p300 = por %p298, %p299
      %p301 = scmp.ne.s32.totalorder %s292, %s293
      %p302 = scmp.eq.s32.totalorder %s30, 0
      %p303 = por %p301, %p302
      %p304 = scmp.ne.s32.totalorder %s292, %s293
      %p305 = scmp.eq.s32.totalorder %s31, 1
      %p306 = por %p304, %p305
      %p308 = scmp.ne.s32.totalorder %s293, %s307
      %p309 = scmp.eq.s32.totalorder %s31, 0
      %p310 = por %p308, %p309
      %s312 = sadd.s32 %s311, 1
      %p315 = scmp.eq.s32.totalorder %s25, 1
      %p316 = scmp.ne.s32.totalorder %s311, %s313
      %p317 = scmp.eq.s32.totalorder %s25, 0
      %p318 = por %p316, %p317
      %p319 = scmp.ne.s32.totalorder %s311, %s313
      %p320 = scmp.eq.s32.totalorder %s30, 1
      %p321 = por %p319, %p320
      %p322 = scmp.ne.s32.totalorder %s313, %s314
      %p323 = scmp.eq.s32.totalorder %s30, 0
      %p324 = por %p322, %p323
      %p325 = scmp.ne.s32.totalorder %s313, %s314
      %p326 = scmp.eq.s32.totalorder %s31, 1
      %p327 = por %p325, %p326
      %p329 = scmp.ne.s32.totalorder %s314, %s328
      %p330 = scmp.eq.s32.totalorder %s31, 0
      %p331 = por %p329, %p330
      %s333 = sadd.s32 %s332, 1
      %p336 = scmp.eq.s32.totalorder %s25, 1
      %p337 = scmp.ne.s32.totalorder %s332, %s334
      %p338 = scmp.eq.s32.totalorder %s25, 0
      %p339 = por %p337, %p338
      %p340 = scmp.ne.s32.totalorder %s332, %s334
      %p341 = scmp.eq.s32.totalorder %s30, 1
      %p342 = por %p340, %p341
      %p343 = scmp.ne.s32.totalorder %s334, %s335
      %p344 = scmp.eq.s32.totalorder %s30, 0
      %p345 = por %p343, %p344
      %p346 = scmp.ne.s32.totalorder %s334, %s335
      %p347 = scmp.eq.s32.totalorder %s31, 1
      %p348 = por %p346, %p347
      %p350 = scmp.ne.s32.totalorder %s335, %s349
      %p351 = scmp.eq.s32.totalorder %s31, 0
      %p352 = por %p350, %p351
      %s354 = sadd.s32 %s353, 1
      %p357 = scmp.eq.s32.totalorder %s25, 1
      %p358 = scmp.ne.s32.totalorder %s353, %s355
      %p359 = scmp.eq.s32.totalorder %s25, 0
      %p360 = por %p358, %p359
      %p361 = scmp.ne.s32.totalorder %s353, %s355
      %p362 = scmp.eq.s32.totalorder %s30, 1
      %p363 = por %p361, %p362
      %p364 = scmp.ne.s32.totalorder %s355, %s356
      %p365 = scmp.eq.s32.totalorder %s30, 0
      %p366 = por %p364, %p365
      %p367 = scmp.ne.s32.totalorder %s355, %s356
      %p368 = scmp.eq.s32.totalorder %s31, 1
      %p369 = por %p367, %p368
      %p371 = scmp.ne.s32.totalorder %s356, %s370
      %p372 = scmp.eq.s32.totalorder %s31, 0
      %p373 = por %p371, %p372
      %s374 = ssub.s32 %s25, %s32
      %p375 = scmp.eq.s32.totalorder %s374, 0
      %s377 = sadd.s32 %s376, 1
      %s378 = scalar_select %p375, %s376, %s377
      %p381 = pneg %p375
      %p382 = scmp.eq.s32.totalorder %s25, 1
      %p383 = por %p381, %p382
      %p384 = scmp.ne.s32.totalorder %s376, %s379
      %p385 = scmp.eq.s32.totalorder %s25, 0
      %p386 = por %p384, %p385
      %p387 = scmp.ne.s32.totalorder %s376, %s379
      %p388 = scmp.eq.s32.totalorder %s30, 1
      %p389 = por %p387, %p388
      %p390 = scmp.ne.s32.totalorder %s379, %s380
      %p391 = scmp.eq.s32.totalorder %s30, 0
      %p392 = por %p390, %p391
      %p393 = scmp.ne.s32.totalorder %s379, %s380
      %p394 = scmp.eq.s32.totalorder %s31, 1
      %p395 = por %p393, %p394
      %p397 = scmp.ne.s32.totalorder %s380, %s396
      %p398 = scmp.eq.s32.totalorder %s31, 0
      %p399 = por %p397, %p398
      %p400 = scmp.le.s32.totalorder 1, %s25
      %p401 = scmp.lt.s32.totalorder %s25, 3
      %p402 = pnand %p400, %p401
      %p403 = pneg %p402
      // Predicated region
      $region9: #{tpu_custom_call.1} parent=5 // pred_check
        _
      $region10: #{tpu_custom_call.1} parent=5 // pred_check_branch
        %405 = sbr.rel (%p402) target = $region12
      $region11: #{tpu_custom_call.1} parent=5 // pred_region
        %s406 = ssub.s32 %s25, 1
        // Predicated region
        $region13: #{tpu_custom_call.1} parent=11 // pred_check
          %p407 = pneg %p72
        $region14: #{tpu_custom_call.1} parent=11 // pred_check_branch
          %409 = sbr.rel (%p407) target = $region16
        $region15: #{tpu_custom_call.1} parent=11 // pred_region
          _
        $region16: #{tpu_custom_call.1} parent=11 // pred_fallthru
          _
        // Predicated region
        $region17: #{tpu_custom_call.1} parent=11 // pred_check
          %p410 = pneg %p93
        $region18: #{tpu_custom_call.1} parent=11 // pred_check_branch
          %412 = sbr.rel (%p410) target = $region20
        $region19: #{tpu_custom_call.1} parent=11 // pred_region
          _
        $region20: #{tpu_custom_call.1} parent=11 // pred_fallthru
          _
        // Predicated region
        $region21: #{tpu_custom_call.1} parent=11 // pred_check
          %p413 = pneg %p114
        $region22: #{tpu_custom_call.1} parent=11 // pred_check_branch
          %415 = sbr.rel (%p413) target = $region24
        $region23: #{tpu_custom_call.1} parent=11 // pred_region
          _
        $region24: #{tpu_custom_call.1} parent=11 // pred_fallthru
          _
        // Predicated region
        $region25: #{tpu_custom_call.1} parent=11 // pred_check
          %p416 = pneg %p135
        $region26: #{tpu_custom_call.1} parent=11 // pred_check_branch
          %418 = sbr.rel (%p416) target = $region28
        $region27: #{tpu_custom_call.1} parent=11 // pred_region
          _
        $region28: #{tpu_custom_call.1} parent=11 // pred_fallthru
          _
        // Predicated region
        $region29: #{tpu_custom_call.1} parent=11 // pred_check
          %p419 = pneg %p156
        $region30: #{tpu_custom_call.1} parent=11 // pred_check_branch
          %421 = sbr.rel (%p419) target = $region32
        $region31: #{tpu_custom_call.1} parent=11 // pred_region
          _
        $region32: #{tpu_custom_call.1} parent=11 // pred_fallthru
          _
        // Predicated region
        $region33: #{tpu_custom_call.1} parent=11 // pred_check
          %p422 = pneg %p177
        $region34: #{tpu_custom_call.1} parent=11 // pred_check_branch
          %424 = sbr.rel (%p422) target = $region36
        $region35: #{tpu_custom_call.1} parent=11 // pred_region
          _
        $region36: #{tpu_custom_call.1} parent=11 // pred_fallthru
          _
        // Predicated region
        $region37: #{tpu_custom_call.1} parent=11 // pred_check
          %p425 = pneg %p198
        $region38: #{tpu_custom_call.1} parent=11 // pred_check_branch
          %427 = sbr.rel (%p425) target = $region40
        $region39: #{tpu_custom_call.1} parent=11 // pred_region
          _
        $region40: #{tpu_custom_call.1} parent=11 // pred_fallthru
          _
        // Predicated region
        $region41: #{tpu_custom_call.1} parent=11 // pred_check
          %p428 = pneg %p219
        $region42: #{tpu_custom_call.1} parent=11 // pred_check_branch
          %430 = sbr.rel (%p428) target = $region44
        $region43: #{tpu_custom_call.1} parent=11 // pred_region
          _
        $region44: #{tpu_custom_call.1} parent=11 // pred_fallthru
          _
        // Predicated region
        $region45: #{tpu_custom_call.1} parent=11 // pred_check
          %p431 = pneg %p240
        $region46: #{tpu_custom_call.1} parent=11 // pred_check_branch
          %433 = sbr.rel (%p431) target = $region48
        $region47: #{tpu_custom_call.1} parent=11 // pred_region
          _
        $region48: #{tpu_custom_call.1} parent=11 // pred_fallthru
          _
        // Predicated region
        $region49: #{tpu_custom_call.1} parent=11 // pred_check
          %p434 = pneg %p261
        $region50: #{tpu_custom_call.1} parent=11 // pred_check_branch
          %436 = sbr.rel (%p434) target = $region52
        $region51: #{tpu_custom_call.1} parent=11 // pred_region
          _
        $region52: #{tpu_custom_call.1} parent=11 // pred_fallthru
          _
        // Predicated region
        $region53: #{tpu_custom_call.1} parent=11 // pred_check
          %p437 = pneg %p282
        $region54: #{tpu_custom_call.1} parent=11 // pred_check_branch
          %439 = sbr.rel (%p437) target = $region56
        $region55: #{tpu_custom_call.1} parent=11 // pred_region
          _
        $region56: #{tpu_custom_call.1} parent=11 // pred_fallthru
          _
        // Predicated region
        $region57: #{tpu_custom_call.1} parent=11 // pred_check
          %p440 = pneg %p303
        $region58: #{tpu_custom_call.1} parent=11 // pred_check_branch
          %442 = sbr.rel (%p440) target = $region60
        $region59: #{tpu_custom_call.1} parent=11 // pred_region
          _
        $region60: #{tpu_custom_call.1} parent=11 // pred_fallthru
          _
        // Predicated region
        $region61: #{tpu_custom_call.1} parent=11 // pred_check
          %p443 = pneg %p324
        $region62: #{tpu_custom_call.1} parent=11 // pred_check_branch
          %445 = sbr.rel (%p443) target = $region64
        $region63: #{tpu_custom_call.1} parent=11 // pred_region
          _
        $region64: #{tpu_custom_call.1} parent=11 // pred_fallthru
          _
        // Predicated region
        $region65: #{tpu_custom_call.1} parent=11 // pred_check
          %p446 = pneg %p345
        $region66: #{tpu_custom_call.1} parent=11 // pred_check_branch
          %448 = sbr.rel (%p446) target = $region68
        $region67: #{tpu_custom_call.1} parent=11 // pred_region
          _
        $region68: #{tpu_custom_call.1} parent=11 // pred_fallthru
          _
        // Predicated region
        $region69: #{tpu_custom_call.1} parent=11 // pred_check
          %p449 = pneg %p366
        $region70: #{tpu_custom_call.1} parent=11 // pred_check_branch
          %451 = sbr.rel (%p449) target = $region72
        $region71: #{tpu_custom_call.1} parent=11 // pred_region
          _
        $region72: #{tpu_custom_call.1} parent=11 // pred_fallthru
          _
      $region12: #{tpu_custom_call.1} parent=5 // pred_fallthru
        _
      %p452 = scmp.lt.s32.totalorder %s25, 2
      // Predicated region
      $region73: #{tpu_custom_call.1} parent=5 // pred_check
        %p453 = pneg %p452
      $region74: #{tpu_custom_call.1} parent=5 // pred_check_branch
        %455 = sbr.rel (%p453) target = $region76
      $region75: #{tpu_custom_call.1} parent=5 // pred_region
        // Predicated region
        $region77: #{tpu_custom_call.1} parent=75 // pred_check
          %p456 = pneg %p45
        $region78: #{tpu_custom_call.1} parent=75 // pred_check_branch
          %458 = sbr.rel (%p456) target = $region80
        $region79: #{tpu_custom_call.1} parent=75 // pred_region
          %p459 = scmp.lt.s32.totalorder %s25, 1
          %s460 = scalar_select %p459, %s25, 1
          %s461 = smul.addr %s460, 8
          %s462 = scalar_lea.vmem %s0, %s461
        $region80: #{tpu_custom_call.1} parent=75 // pred_fallthru
          _
      $region76: #{tpu_custom_call.1} parent=5 // pred_fallthru
        _
      %p463 = scmp.le.s32.totalorder 1, %s25
      %p464 = scmp.lt.s32.totalorder %s25, 3
      %p465 = pnand %p463, %p464
      %p466 = pneg %p465
      // Predicated region
      $region81: #{tpu_custom_call.1} parent=5 // pred_check
        _
      $region82: #{tpu_custom_call.1} parent=5 // pred_check_branch
        %468 = sbr.rel (%p465) target = $region84
      $region83: #{tpu_custom_call.1} parent=5 // pred_region
        %s469 = ssub.s32 %s25, 1
        %p470 = scmp.lt.s32.totalorder %s30, 1
        %s471 = scalar_select %p470, %s30, 1
        %s472 = smul.addr %s471, 8
        %s473 = scalar_lea.vmem %s0, %s472
        %p474 = pneg %p51
        %p475 = pneg %p48
        %p476 = pneg %p72
        %p477 = pneg %p69
        %p478 = pneg %p93
        %p479 = pneg %p90
        %p480 = pneg %p114
        %p481 = pneg %p111
        %p482 = pneg %p135
        %p483 = pneg %p132
        %p484 = pneg %p156
        %p485 = pneg %p153
        %p486 = pneg %p177
        %p487 = pneg %p174
        %p488 = pneg %p198
        %p489 = pneg %p195
        %p490 = pneg %p219
        %p491 = pneg %p216
        %p492 = pneg %p240
        %p493 = pneg %p237
        %p494 = pneg %p261
        %p495 = pneg %p258
        %p496 = pneg %p282
        %p497 = pneg %p279
        %p498 = pneg %p303
        %p499 = pneg %p300
        %p500 = pneg %p324
        %p501 = pneg %p321
        %p502 = pneg %p345
        %p503 = pneg %p342
        %p504 = pneg %p366
        %p505 = pneg %p363
        %p506 = pneg %p392
        %p507 = pneg %p389
        %s508 = sand.u32 %s379, 1
        %s509 = scalar_lea.sflag [#allocation3], %s508
        %s510 = sand.u32 %s379, 1
        %s511 = smul.addr %s510, 4
        %s512 = scalar_lea.vmem [#allocation2], %s511
        %p513 = scmp.lt.s32.totalorder %s30, 1
        %s514 = scalar_select %p513, %s30, 1
        %s515 = smul.addr %s514, 8
        %s516 = scalar_lea.vmem %s0, %s515
        %v518 = vld [vmem:[%s516] sm:$0xff]
        %v519 = vlaneseq
        %v520 = vshrl.u32 %v519, 7
        %v521 = vsub.s32 0, %v520
        %v522 = vrot.slane %v518, %v521
        %v523 = vlaneseq
        %v524 = vshrl.u32 %v523, 7
        %v525 = vsub.s32 1, %v524
        %v526 = vrot.slane %v518, %v525
        %v527 = vlaneseq
        %v528 = vshrl.u32 %v527, 7
        %v529 = vsub.s32 2, %v528
        %v530 = vrot.slane %v518, %v529
        %vm531 = vcmask 1045504
        %v532 = vsel %vm531, %v522, %v526
        %vm533 = vcmask 1043456
        %v534 = vsel %vm533, %v526, %v530
        %vm535 = vcmask 1041408
        %v536 = vsel %vm535, %v530, 0.0
        %v537 = vld [vmem:[%s1] sm:$0xff]
        %v538 = vld [vmem:[%s1 + $0x8] sm:$0xff]
        %v539 = vld [vmem:[%s1 + $0x10] sm:$0xff]
        %541 = vset.pattern.permute.xlu0 0
        %542 = vperm.xlu0 %541, %v537
        %v543 = vpop.permute.xlu0 %542
        %546 = vset.pattern.permute.xlu0 0
        %547 = vperm.xlu0 %546, %v538
        %v548 = vpop.permute.xlu0 %547
        %551 = vset.pattern.permute.xlu0 0
        %552 = vperm.xlu0 %551, %v539
        %v553 = vpop.permute.xlu0 %552
        %v555 = vmul.f32 %v532, %v543
        %v556 = vmul.f32 %v534, %v548
        %v557 = vmul.f32 %v536, %v553
        %v558 = vand.u32 2147483647, %v555
        %vm559 = vcmp.le.f32.partialorder %v558, 0.7853982
        %vm560 = vcmp.lt.s32.totalorder %v555, 0
        %v561 = vand.u32 %v555, 2139095040
        %v562 = vshrl.u32 %v561, 23
        %v563 = vsub.s32 %v562, 127
        %v564 = vand.u32 2147483647, %v555
        %v565 = vand.u32 %v564, 8388607
        %v566 = vor.u32 %v565, 8388608
        %v567 = vsub.s32 0, %v566
        %v568 = vadd.s32 %v563, 1
        %vm569 = vcmp.gt.s32.totalorder %v568, 0
        %v570 = vsel %vm569, %v568, 0
        %v571 = vshrl.u32 %v570, 5
        %v572 = vand.u32 %v570, 31
        %v573 = vsub.s32 32, %v572
        %v574 = vshrl.u32 683565275, %v573
        %v575 = vshll.u32 683565275, %v572
        %v576 = vshrl.u32 2475754826, %v573
        %v577 = vor.u32 %v575, %v576
        %v578 = vshll.u32 2475754826, %v572
        %v579 = vshrl.u32 2131351028, %v573
        %v580 = vor.u32 %v578, %v579
        %v581 = vshll.u32 2131351028, %v572
        %v582 = vshrl.u32 2102212464, %v573
        %v583 = vor.u32 %v581, %v582
        %v584 = vshll.u32 2102212464, %v572
        %v585 = vshrl.u32 920167782, %v573
        %v586 = vor.u32 %v584, %v585
        %v587 = vshll.u32 920167782, %v572
        %v588 = vshrl.u32 1326507024, %v573
        %v589 = vor.u32 %v587, %v588
        %vm590 = vcmp.lt.s32.totalorder %v571, 1
        %vm591 = vcmp.lt.s32.totalorder %v571, 2
        %vm592 = vcmp.lt.s32.totalorder %v571, 3
        %vm593 = vcmp.lt.s32.totalorder %v571, 4
        %v594 = vsel %vm590, %v574, %v577
        %v595 = vsel %vm593, %v583, 2102212464
        %v596 = vsel %vm592, %v580, %v595
        %v597 = vsel %vm591, %v594, %v596
        %v598 = vsel %vm590, %v577, %v580
        %v599 = vsel %vm593, %v586, 920167782
        %v600 = vsel %vm592, %v583, %v599
        %v601 = vsel %vm591, %v598, %v600
        %v602 = vsel %vm590, %v580, %v583
        %v603 = vsel %vm593, %v589, 1326507024
        %v604 = vsel %vm592, %v586, %v603
        %v605 = vsel %vm591, %v602, %v604
        %v606 = vshll.u32 %v566, 8
        %v607 = vmul.u32.u64.compose %v606, %v605
        %v608 = vextract.low.u32 %v607
        %v609 = vextract.high.u32 %v607
        %v610 = vmul.u32.u64.compose %v606, %v601
        %v611 = vextract.low.u32 %v610
        %v612 = vextract.high.u32 %v610
        %v613 = vmul.u32 %v606, %v597
        %v614 = vadd.s32 %v609, %v611
        %vm615 = vc.u32 %v609, %v611
        %v616 = vadd.s32 %v612, 1
        %v617 = vsel %vm615, %v616, %v612
        %v618 = vadd.s32 %v613, %v617
        %v619 = vadd.s32 %v618, 536870912
        %v620 = vshrl.u32 %v619, 30
        %v621 = vshll.u32 %v620, 30
        %v622 = vsub.s32 %v618, %v621
        %vm623 = vcmp.lt.s32.totalorder %v622, 0
        %v624 = vsub.s32 0, %v622
        %v625 = vsel %vm623, %v624, %v622
        %v626 = vclz %v625
        %v627 = vsub.s32 %v626, 2
        %vm628 = vcmp.gt.s32.totalorder 0, %v627
        %v629 = vsel %vm628, 0, %v627
        %v630 = vsub.s32 32, %v629
        %v631 = vshll.u32 %v622, %v629
        %v632 = vshrl.u32 %v614, %v630
        %v633 = vor.u32 %v631, %v632
        %v634 = vsub.s32 4294967266, %v629
        %v635 = vadd.s32 %v634, 127
        %v636 = vshll.u32 %v635, 23
        %v637 = vor.u32 4788187, %v636
        %v638 = vand.u32 2147483647, %v637
        %v640 = vcvt.s32.f32 %v633
        %v641 = vmul.f32 %v640, %v638
        %v642 = vxor.u32 %v641, 2147483648
        %v643 = vsel %vm560, %v642, %v641
        %v644 = vsub.s32 4, %v620
        %v645 = vsel %vm560, %v644, %v620
        %v646 = vsel %vm559, %v555, %v643
        %v647 = vsel %vm559, 0, %v645
        %v648 = vcosq.f32.pop %v646
        %v649 = vsinq.f32.pop %v646
        %vm650 = vweird.f32 %v555
        %v651 = vadd.s32 %v647, 3
        %v652 = vand.u32 %v651, 3
        %vm653 = vcmp.lt.s32.totalorder %v652, 2
        %vm654 = vcmp.eq.s32.totalorder %v652, 0
        %v655 = vxor.u32 %v649, 2147483648
        %v656 = vsel %vm654, %v648, %v655
        %vm657 = vcmp.eq.s32.totalorder %v652, 2
        %v658 = vxor.u32 %v648, 2147483648
        %v659 = vsel %vm657, %v658, %v649
        %v660 = vsel %vm653, %v656, %v659
        %v661 = vsel %vm650, nan, %v660
        %v662 = vand.u32 2147483647, %v556
        %vm663 = vcmp.le.f32.partialorder %v662, 0.7853982
        %vm664 = vcmp.lt.s32.totalorder %v556, 0
        %v665 = vand.u32 %v556, 2139095040
        %v666 = vshrl.u32 %v665, 23
        %v667 = vsub.s32 %v666, 127
        %v668 = vand.u32 2147483647, %v556
        %v669 = vand.u32 %v668, 8388607
        %v670 = vor.u32 %v669, 8388608
        %v671 = vsub.s32 0, %v670
        %v672 = vadd.s32 %v667, 1
        %vm673 = vcmp.gt.s32.totalorder %v672, 0
        %v674 = vsel %vm673, %v672, 0
        %v675 = vshrl.u32 %v674, 5
        %v676 = vand.u32 %v674, 31
        %v677 = vsub.s32 32, %v676
        %v678 = vshrl.u32 683565275, %v677
        %v679 = vshll.u32 683565275, %v676
        %v680 = vshrl.u32 2475754826, %v677
        %v681 = vor.u32 %v679, %v680
        %v682 = vshll.u32 2475754826, %v676
        %v683 = vshrl.u32 2131351028, %v677
        %v684 = vor.u32 %v682, %v683
        %v685 = vshll.u32 2131351028, %v676
        %v686 = vshrl.u32 2102212464, %v677
        %v687 = vor.u32 %v685, %v686
        %v688 = vshll.u32 2102212464, %v676
        %v689 = vshrl.u32 920167782, %v677
        %v690 = vor.u32 %v688, %v689
        %v691 = vshll.u32 920167782, %v676
        %v692 = vshrl.u32 1326507024, %v677
        %v693 = vor.u32 %v691, %v692
        %vm694 = vcmp.lt.s32.totalorder %v675, 1
        %vm695 = vcmp.lt.s32.totalorder %v675, 2
        %vm696 = vcmp.lt.s32.totalorder %v675, 3
        %vm697 = vcmp.lt.s32.totalorder %v675, 4
        %v698 = vsel %vm694, %v678, %v681
        %v699 = vsel %vm697, %v687, 2102212464
        %v700 = vsel %vm696, %v684, %v699
        %v701 = vsel %vm695, %v698, %v700
        %v702 = vsel %vm694, %v681, %v684
        %v703 = vsel %vm697, %v690, 920167782
        %v704 = vsel %vm696, %v687, %v703
        %v705 = vsel %vm695, %v702, %v704
        %v706 = vsel %vm694, %v684, %v687
        %v707 = vsel %vm697, %v693, 1326507024
        %v708 = vsel %vm696, %v690, %v707
        %v709 = vsel %vm695, %v706, %v708
        %v710 = vshll.u32 %v670, 8
        %v711 = vmul.u32.u64.compose %v710, %v709
        %v712 = vextract.low.u32 %v711
        %v713 = vextract.high.u32 %v711
        %v714 = vmul.u32.u64.compose %v710, %v705
        %v715 = vextract.low.u32 %v714
        %v716 = vextract.high.u32 %v714
        %v717 = vmul.u32 %v710, %v701
        %v718 = vadd.s32 %v713, %v715
        %vm719 = vc.u32 %v713, %v715
        %v720 = vadd.s32 %v716, 1
        %v721 = vsel %vm719, %v720, %v716
        %v722 = vadd.s32 %v717, %v721
        %v723 = vadd.s32 %v722, 536870912
        %v724 = vshrl.u32 %v723, 30
        %v725 = vshll.u32 %v724, 30
        %v726 = vsub.s32 %v722, %v725
        %vm727 = vcmp.lt.s32.totalorder %v726, 0
        %v728 = vsub.s32 0, %v726
        %v729 = vsel %vm727, %v728, %v726
        %v730 = vclz %v729
        %v731 = vsub.s32 %v730, 2
        %vm732 = vcmp.gt.s32.totalorder 0, %v731
        %v733 = vsel %vm732, 0, %v731
        %v734 = vsub.s32 32, %v733
        %v735 = vshll.u32 %v726, %v733
        %v736 = vshrl.u32 %v718, %v734
        %v737 = vor.u32 %v735, %v736
        %v738 = vsub.s32 4294967266, %v733
        %v739 = vadd.s32 %v738, 127
        %v740 = vshll.u32 %v739, 23
        %v741 = vor.u32 4788187, %v740
        %v742 = vand.u32 2147483647, %v741
        %v744 = vcvt.s32.f32 %v737
        %v745 = vmul.f32 %v744, %v742
        %v746 = vxor.u32 %v745, 2147483648
        %v747 = vsel %vm664, %v746, %v745
        %v748 = vsub.s32 4, %v724
        %v749 = vsel %vm664, %v748, %v724
        %v750 = vsel %vm663, %v556, %v747
        %v751 = vsel %vm663, 0, %v749
        %v752 = vcosq.f32.pop %v750
        %v753 = vsinq.f32.pop %v750
        %vm754 = vweird.f32 %v556
        %v755 = vadd.s32 %v751, 3
        %v756 = vand.u32 %v755, 3
        %vm757 = vcmp.lt.s32.totalorder %v756, 2
        %vm758 = vcmp.eq.s32.totalorder %v756, 0
        %v759 = vxor.u32 %v753, 2147483648
        %v760 = vsel %vm758, %v752, %v759
        %vm761 = vcmp.eq.s32.totalorder %v756, 2
        %v762 = vxor.u32 %v752, 2147483648
        %v763 = vsel %vm761, %v762, %v753
        %v764 = vsel %vm757, %v760, %v763
        %v765 = vsel %vm754, nan, %v764
        %v766 = vand.u32 2147483647, %v557
        %vm767 = vcmp.le.f32.partialorder %v766, 0.7853982
        %vm768 = vcmp.lt.s32.totalorder %v557, 0
        %v769 = vand.u32 %v557, 2139095040
        %v770 = vshrl.u32 %v769, 23
        %v771 = vsub.s32 %v770, 127
        %v772 = vand.u32 2147483647, %v557
        %v773 = vand.u32 %v772, 8388607
        %v774 = vor.u32 %v773, 8388608
        %v775 = vsub.s32 0, %v774
        %v776 = vadd.s32 %v771, 1
        %vm777 = vcmp.gt.s32.totalorder %v776, 0
        %v778 = vsel %vm777, %v776, 0
        %v779 = vshrl.u32 %v778, 5
        %v780 = vand.u32 %v778, 31
        %v781 = vsub.s32 32, %v780
        %v782 = vshrl.u32 683565275, %v781
        %v783 = vshll.u32 683565275, %v780
        %v784 = vshrl.u32 2475754826, %v781
        %v785 = vor.u32 %v783, %v784
        %v786 = vshll.u32 2475754826, %v780
        %v787 = vshrl.u32 2131351028, %v781
        %v788 = vor.u32 %v786, %v787
        %v789 = vshll.u32 2131351028, %v780
        %v790 = vshrl.u32 2102212464, %v781
        %v791 = vor.u32 %v789, %v790
        %v792 = vshll.u32 2102212464, %v780
        %v793 = vshrl.u32 920167782, %v781
        %v794 = vor.u32 %v792, %v793
        %v795 = vshll.u32 920167782, %v780
        %v796 = vshrl.u32 1326507024, %v781
        %v797 = vor.u32 %v795, %v796
        %vm798 = vcmp.lt.s32.totalorder %v779, 1
        %vm799 = vcmp.lt.s32.totalorder %v779, 2
        %vm800 = vcmp.lt.s32.totalorder %v779, 3
        %vm801 = vcmp.lt.s32.totalorder %v779, 4
        %v802 = vsel %vm798, %v782, %v785
        %v803 = vsel %vm801, %v791, 2102212464
        %v804 = vsel %vm800, %v788, %v803
        %v805 = vsel %vm799, %v802, %v804
        %v806 = vsel %vm798, %v785, %v788
        %v807 = vsel %vm801, %v794, 920167782
        %v808 = vsel %vm800, %v791, %v807
        %v809 = vsel %vm799, %v806, %v808
        %v810 = vsel %vm798, %v788, %v791
        %v811 = vsel %vm801, %v797, 1326507024
        %v812 = vsel %vm800, %v794, %v811
        %v813 = vsel %vm799, %v810, %v812
        %v814 = vshll.u32 %v774, 8
        %v815 = vmul.u32.u64.compose %v814, %v813
        %v816 = vextract.low.u32 %v815
        %v817 = vextract.high.u32 %v815
        %v818 = vmul.u32.u64.compose %v814, %v809
        %v819 = vextract.low.u32 %v818
        %v820 = vextract.high.u32 %v818
        %v821 = vmul.u32 %v814, %v805
        %v822 = vadd.s32 %v817, %v819
        %vm823 = vc.u32 %v817, %v819
        %v824 = vadd.s32 %v820, 1
        %v825 = vsel %vm823, %v824, %v820
        %v826 = vadd.s32 %v821, %v825
        %v827 = vadd.s32 %v826, 536870912
        %v828 = vshrl.u32 %v827, 30
        %v829 = vshll.u32 %v828, 30
        %v830 = vsub.s32 %v826, %v829
        %vm831 = vcmp.lt.s32.totalorder %v830, 0
        %v832 = vsub.s32 0, %v830
        %v833 = vsel %vm831, %v832, %v830
        %v834 = vclz %v833
        %v835 = vsub.s32 %v834, 2
        %vm836 = vcmp.gt.s32.totalorder 0, %v835
        %v837 = vsel %vm836, 0, %v835
        %v838 = vsub.s32 32, %v837
        %v839 = vshll.u32 %v830, %v837
        %v840 = vshrl.u32 %v822, %v838
        %v841 = vor.u32 %v839, %v840
        %v842 = vsub.s32 4294967266, %v837
        %v843 = vadd.s32 %v842, 127
        %v844 = vshll.u32 %v843, 23
        %v845 = vor.u32 4788187, %v844
        %v846 = vand.u32 2147483647, %v845
        %v848 = vcvt.s32.f32 %v841
        %v849 = vmul.f32 %v848, %v846
        %v850 = vxor.u32 %v849, 2147483648
        %v851 = vsel %vm768, %v850, %v849
        %v852 = vsub.s32 4, %v828
        %v853 = vsel %vm768, %v852, %v828
        %v854 = vsel %vm767, %v557, %v851
        %v855 = vsel %vm767, 0, %v853
        %v856 = vcosq.f32.pop %v854
        %v857 = vsinq.f32.pop %v854
        %vm858 = vweird.f32 %v557
        %v859 = vadd.s32 %v855, 3
        %v860 = vand.u32 %v859, 3
        %vm861 = vcmp.lt.s32.totalorder %v860, 2
        %vm862 = vcmp.eq.s32.totalorder %v860, 0
        %v863 = vxor.u32 %v857, 2147483648
        %v864 = vsel %vm862, %v856, %v863
        %vm865 = vcmp.eq.s32.totalorder %v860, 2
        %v866 = vxor.u32 %v856, 2147483648
        %v867 = vsel %vm865, %v866, %v857
        %v868 = vsel %vm861, %v864, %v867
        %v869 = vsel %vm858, nan, %v868
        %v870 = vand.u32 2147483647, %v555
        %vm871 = vcmp.le.f32.partialorder %v870, 0.7853982
        %vm872 = vcmp.lt.s32.totalorder %v555, 0
        %v873 = vand.u32 %v555, 2139095040
        %v874 = vshrl.u32 %v873, 23
        %v875 = vsub.s32 %v874, 127
        %v876 = vand.u32 2147483647, %v555
        %v877 = vand.u32 %v876, 8388607
        %v878 = vor.u32 %v877, 8388608
        %v879 = vsub.s32 0, %v878
        %v880 = vadd.s32 %v875, 1
        %vm881 = vcmp.gt.s32.totalorder %v880, 0
        %v882 = vsel %vm881, %v880, 0
        %v883 = vshrl.u32 %v882, 5
        %v884 = vand.u32 %v882, 31
        %v885 = vsub.s32 32, %v884
        %v886 = vshrl.u32 683565275, %v885
        %v887 = vshll.u32 683565275, %v884
        %v888 = vshrl.u32 2475754826, %v885
        %v889 = vor.u32 %v887, %v888
        %v890 = vshll.u32 2475754826, %v884
        %v891 = vshrl.u32 2131351028, %v885
        %v892 = vor.u32 %v890, %v891
        %v893 = vshll.u32 2131351028, %v884
        %v894 = vshrl.u32 2102212464, %v885
        %v895 = vor.u32 %v893, %v894
        %v896 = vshll.u32 2102212464, %v884
        %v897 = vshrl.u32 920167782, %v885
        %v898 = vor.u32 %v896, %v897
        %v899 = vshll.u32 920167782, %v884
        %v900 = vshrl.u32 1326507024, %v885
        %v901 = vor.u32 %v899, %v900
        %vm902 = vcmp.lt.s32.totalorder %v883, 1
        %vm903 = vcmp.lt.s32.totalorder %v883, 2
        %vm904 = vcmp.lt.s32.totalorder %v883, 3
        %vm905 = vcmp.lt.s32.totalorder %v883, 4
        %v906 = vsel %vm902, %v886, %v889
        %v907 = vsel %vm905, %v895, 2102212464
        %v908 = vsel %vm904, %v892, %v907
        %v909 = vsel %vm903, %v906, %v908
        %v910 = vsel %vm902, %v889, %v892
        %v911 = vsel %vm905, %v898, 920167782
        %v912 = vsel %vm904, %v895, %v911
        %v913 = vsel %vm903, %v910, %v912
        %v914 = vsel %vm902, %v892, %v895
        %v915 = vsel %vm905, %v901, 1326507024
        %v916 = vsel %vm904, %v898, %v915
        %v917 = vsel %vm903, %v914, %v916
        %v918 = vshll.u32 %v878, 8
        %v919 = vmul.u32.u64.compose %v918, %v917
        %v920 = vextract.low.u32 %v919
        %v921 = vextract.high.u32 %v919
        %v922 = vmul.u32.u64.compose %v918, %v913
        %v923 = vextract.low.u32 %v922
        %v924 = vextract.high.u32 %v922
        %v925 = vmul.u32 %v918, %v909
        %v926 = vadd.s32 %v921, %v923
        %vm927 = vc.u32 %v921, %v923
        %v928 = vadd.s32 %v924, 1
        %v929 = vsel %vm927, %v928, %v924
        %v930 = vadd.s32 %v925, %v929
        %v931 = vadd.s32 %v930, 536870912
        %v932 = vshrl.u32 %v931, 30
        %v933 = vshll.u32 %v932, 30
        %v934 = vsub.s32 %v930, %v933
        %vm935 = vcmp.lt.s32.totalorder %v934, 0
        %v936 = vsub.s32 0, %v934
        %v937 = vsel %vm935, %v936, %v934
        %v938 = vclz %v937
        %v939 = vsub.s32 %v938, 2
        %vm940 = vcmp.gt.s32.totalorder 0, %v939
        %v941 = vsel %vm940, 0, %v939
        %v942 = vsub.s32 32, %v941
        %v943 = vshll.u32 %v934, %v941
        %v944 = vshrl.u32 %v926, %v942
        %v945 = vor.u32 %v943, %v944
        %v946 = vsub.s32 4294967266, %v941
        %v947 = vadd.s32 %v946, 127
        %v948 = vshll.u32 %v947, 23
        %v949 = vor.u32 4788187, %v948
        %v950 = vand.u32 2147483647, %v949
        %v952 = vcvt.s32.f32 %v945
        %v953 = vmul.f32 %v952, %v950
        %v954 = vxor.u32 %v953, 2147483648
        %v955 = vsel %vm872, %v954, %v953
        %v956 = vsub.s32 4, %v932
        %v957 = vsel %vm872, %v956, %v932
        %v958 = vsel %vm871, %v555, %v955
        %v959 = vsel %vm871, 0, %v957
        %v960 = vcosq.f32.pop %v958
        %v961 = vsinq.f32.pop %v958
        %vm962 = vweird.f32 %v555
        %v963 = vand.u32 %v959, 3
        %vm964 = vcmp.lt.s32.totalorder %v963, 2
        %vm965 = vcmp.eq.s32.totalorder %v963, 0
        %v966 = vxor.u32 %v961, 2147483648
        %v967 = vsel %vm965, %v960, %v966
        %vm968 = vcmp.eq.s32.totalorder %v963, 2
        %v969 = vxor.u32 %v960, 2147483648
        %v970 = vsel %vm968, %v969, %v961
        %v971 = vsel %vm964, %v967, %v970
        %v972 = vsel %vm962, nan, %v971
        %v973 = vand.u32 2147483647, %v556
        %vm974 = vcmp.le.f32.partialorder %v973, 0.7853982
        %vm975 = vcmp.lt.s32.totalorder %v556, 0
        %v976 = vand.u32 %v556, 2139095040
        %v977 = vshrl.u32 %v976, 23
        %v978 = vsub.s32 %v977, 127
        %v979 = vand.u32 2147483647, %v556
        %v980 = vand.u32 %v979, 8388607
        %v981 = vor.u32 %v980, 8388608
        %v982 = vsub.s32 0, %v981
        %v983 = vadd.s32 %v978, 1
        %vm984 = vcmp.gt.s32.totalorder %v983, 0
        %v985 = vsel %vm984, %v983, 0
        %v986 = vshrl.u32 %v985, 5
        %v987 = vand.u32 %v985, 31
        %v988 = vsub.s32 32, %v987
        %v989 = vshrl.u32 683565275, %v988
        %v990 = vshll.u32 683565275, %v987
        %v991 = vshrl.u32 2475754826, %v988
        %v992 = vor.u32 %v990, %v991
        %v993 = vshll.u32 2475754826, %v987
        %v994 = vshrl.u32 2131351028, %v988
        %v995 = vor.u32 %v993, %v994
        %v996 = vshll.u32 2131351028, %v987
        %v997 = vshrl.u32 2102212464, %v988
        %v998 = vor.u32 %v996, %v997
        %v999 = vshll.u32 2102212464, %v987
        %v1000 = vshrl.u32 920167782, %v988
        %v1001 = vor.u32 %v999, %v1000
        %v1002 = vshll.u32 920167782, %v987
        %v1003 = vshrl.u32 1326507024, %v988
        %v1004 = vor.u32 %v1002, %v1003
        %vm1005 = vcmp.lt.s32.totalorder %v986, 1
        %vm1006 = vcmp.lt.s32.totalorder %v986, 2
        %vm1007 = vcmp.lt.s32.totalorder %v986, 3
        %vm1008 = vcmp.lt.s32.totalorder %v986, 4
        %v1009 = vsel %vm1005, %v989, %v992
        %v1010 = vsel %vm1008, %v998, 2102212464
        %v1011 = vsel %vm1007, %v995, %v1010
        %v1012 = vsel %vm1006, %v1009, %v1011
        %v1013 = vsel %vm1005, %v992, %v995
        %v1014 = vsel %vm1008, %v1001, 920167782
        %v1015 = vsel %vm1007, %v998, %v1014
        %v1016 = vsel %vm1006, %v1013, %v1015
        %v1017 = vsel %vm1005, %v995, %v998
        %v1018 = vsel %vm1008, %v1004, 1326507024
        %v1019 = vsel %vm1007, %v1001, %v1018
        %v1020 = vsel %vm1006, %v1017, %v1019
        %v1021 = vshll.u32 %v981, 8
        %v1022 = vmul.u32.u64.compose %v1021, %v1020
        %v1023 = vextract.low.u32 %v1022
        %v1024 = vextract.high.u32 %v1022
        %v1025 = vmul.u32.u64.compose %v1021, %v1016
        %v1026 = vextract.low.u32 %v1025
        %v1027 = vextract.high.u32 %v1025
        %v1028 = vmul.u32 %v1021, %v1012
        %v1029 = vadd.s32 %v1024, %v1026
        %vm1030 = vc.u32 %v1024, %v1026
        %v1031 = vadd.s32 %v1027, 1
        %v1032 = vsel %vm1030, %v1031, %v1027
        %v1033 = vadd.s32 %v1028, %v1032
        %v1034 = vadd.s32 %v1033, 536870912
        %v1035 = vshrl.u32 %v1034, 30
        %v1036 = vshll.u32 %v1035, 30
        %v1037 = vsub.s32 %v1033, %v1036
        %vm1038 = vcmp.lt.s32.totalorder %v1037, 0
        %v1039 = vsub.s32 0, %v1037
        %v1040 = vsel %vm1038, %v1039, %v1037
        %v1041 = vclz %v1040
        %v1042 = vsub.s32 %v1041, 2
        %vm1043 = vcmp.gt.s32.totalorder 0, %v1042
        %v1044 = vsel %vm1043, 0, %v1042
        %v1045 = vsub.s32 32, %v1044
        %v1046 = vshll.u32 %v1037, %v1044
        %v1047 = vshrl.u32 %v1029, %v1045
        %v1048 = vor.u32 %v1046, %v1047
        %v1049 = vsub.s32 4294967266, %v1044
        %v1050 = vadd.s32 %v1049, 127
        %v1051 = vshll.u32 %v1050, 23
        %v1052 = vor.u32 4788187, %v1051
        %v1053 = vand.u32 2147483647, %v1052
        %v1055 = vcvt.s32.f32 %v1048
        %v1056 = vmul.f32 %v1055, %v1053
        %v1057 = vxor.u32 %v1056, 2147483648
        %v1058 = vsel %vm975, %v1057, %v1056
        %v1059 = vsub.s32 4, %v1035
        %v1060 = vsel %vm975, %v1059, %v1035
        %v1061 = vsel %vm974, %v556, %v1058
        %v1062 = vsel %vm974, 0, %v1060
        %v1063 = vcosq.f32.pop %v1061
        %v1064 = vsinq.f32.pop %v1061
        %vm1065 = vweird.f32 %v556
        %v1066 = vand.u32 %v1062, 3
        %vm1067 = vcmp.lt.s32.totalorder %v1066, 2
        %vm1068 = vcmp.eq.s32.totalorder %v1066, 0
        %v1069 = vxor.u32 %v1064, 2147483648
        %v1070 = vsel %vm1068, %v1063, %v1069
        %vm1071 = vcmp.eq.s32.totalorder %v1066, 2
        %v1072 = vxor.u32 %v1063, 2147483648
        %v1073 = vsel %vm1071, %v1072, %v1064
        %v1074 = vsel %vm1067, %v1070, %v1073
        %v1075 = vsel %vm1065, nan, %v1074
        %v1076 = vand.u32 2147483647, %v557
        %vm1077 = vcmp.le.f32.partialorder %v1076, 0.7853982
        %vm1078 = vcmp.lt.s32.totalorder %v557, 0
        %v1079 = vand.u32 %v557, 2139095040
        %v1080 = vshrl.u32 %v1079, 23
        %v1081 = vsub.s32 %v1080, 127
        %v1082 = vand.u32 2147483647, %v557
        %v1083 = vand.u32 %v1082, 8388607
        %v1084 = vor.u32 %v1083, 8388608
        %v1085 = vsub.s32 0, %v1084
        %v1086 = vadd.s32 %v1081, 1
        %vm1087 = vcmp.gt.s32.totalorder %v1086, 0
        %v1088 = vsel %vm1087, %v1086, 0
        %v1089 = vshrl.u32 %v1088, 5
        %v1090 = vand.u32 %v1088, 31
        %v1091 = vsub.s32 32, %v1090
        %v1092 = vshrl.u32 683565275, %v1091
        %v1093 = vshll.u32 683565275, %v1090
        %v1094 = vshrl.u32 2475754826, %v1091
        %v1095 = vor.u32 %v1093, %v1094
        %v1096 = vshll.u32 2475754826, %v1090
        %v1097 = vshrl.u32 2131351028, %v1091
        %v1098 = vor.u32 %v1096, %v1097
        %v1099 = vshll.u32 2131351028, %v1090
        %v1100 = vshrl.u32 2102212464, %v1091
        %v1101 = vor.u32 %v1099, %v1100
        %v1102 = vshll.u32 2102212464, %v1090
        %v1103 = vshrl.u32 920167782, %v1091
        %v1104 = vor.u32 %v1102, %v1103
        %v1105 = vshll.u32 920167782, %v1090
        %v1106 = vshrl.u32 1326507024, %v1091
        %v1107 = vor.u32 %v1105, %v1106
        %vm1108 = vcmp.lt.s32.totalorder %v1089, 1
        %vm1109 = vcmp.lt.s32.totalorder %v1089, 2
        %vm1110 = vcmp.lt.s32.totalorder %v1089, 3
        %vm1111 = vcmp.lt.s32.totalorder %v1089, 4
        %v1112 = vsel %vm1108, %v1092, %v1095
        %v1113 = vsel %vm1111, %v1101, 2102212464
        %v1114 = vsel %vm1110, %v1098, %v1113
        %v1115 = vsel %vm1109, %v1112, %v1114
        %v1116 = vsel %vm1108, %v1095, %v1098
        %v1117 = vsel %vm1111, %v1104, 920167782
        %v1118 = vsel %vm1110, %v1101, %v1117
        %v1119 = vsel %vm1109, %v1116, %v1118
        %v1120 = vsel %vm1108, %v1098, %v1101
        %v1121 = vsel %vm1111, %v1107, 1326507024
        %v1122 = vsel %vm1110, %v1104, %v1121
        %v1123 = vsel %vm1109, %v1120, %v1122
        %v1124 = vshll.u32 %v1084, 8
        %v1125 = vmul.u32.u64.compose %v1124, %v1123
        %v1126 = vextract.low.u32 %v1125
        %v1127 = vextract.high.u32 %v1125
        %v1128 = vmul.u32.u64.compose %v1124, %v1119
        %v1129 = vextract.low.u32 %v1128
        %v1130 = vextract.high.u32 %v1128
        %v1131 = vmul.u32 %v1124, %v1115
        %v1132 = vadd.s32 %v1127, %v1129
        %vm1133 = vc.u32 %v1127, %v1129
        %v1134 = vadd.s32 %v1130, 1
        %v1135 = vsel %vm1133, %v1134, %v1130
        %v1136 = vadd.s32 %v1131, %v1135
        %v1137 = vadd.s32 %v1136, 536870912
        %v1138 = vshrl.u32 %v1137, 30
        %v1139 = vshll.u32 %v1138, 30
        %v1140 = vsub.s32 %v1136, %v1139
        %vm1141 = vcmp.lt.s32.totalorder %v1140, 0
        %v1142 = vsub.s32 0, %v1140
        %v1143 = vsel %vm1141, %v1142, %v1140
        %v1144 = vclz %v1143
        %v1145 = vsub.s32 %v1144, 2
        %vm1146 = vcmp.gt.s32.totalorder 0, %v1145
        %v1147 = vsel %vm1146, 0, %v1145
        %v1148 = vsub.s32 32, %v1147
        %v1149 = vshll.u32 %v1140, %v1147
        %v1150 = vshrl.u32 %v1132, %v1148
        %v1151 = vor.u32 %v1149, %v1150
        %v1152 = vsub.s32 4294967266, %v1147
        %v1153 = vadd.s32 %v1152, 127
        %v1154 = vshll.u32 %v1153, 23
        %v1155 = vor.u32 4788187, %v1154
        %v1156 = vand.u32 2147483647, %v1155
        %v1158 = vcvt.s32.f32 %v1151
        %v1159 = vmul.f32 %v1158, %v1156
        %v1160 = vxor.u32 %v1159, 2147483648
        %v1161 = vsel %vm1078, %v1160, %v1159
        %v1162 = vsub.s32 4, %v1138
        %v1163 = vsel %vm1078, %v1162, %v1138
        %v1164 = vsel %vm1077, %v557, %v1161
        %v1165 = vsel %vm1077, 0, %v1163
        %v1166 = vcosq.f32.pop %v1164
        %v1167 = vsinq.f32.pop %v1164
        %vm1168 = vweird.f32 %v557
        %v1169 = vand.u32 %v1165, 3
        %vm1170 = vcmp.lt.s32.totalorder %v1169, 2
        %vm1171 = vcmp.eq.s32.totalorder %v1169, 0
        %v1172 = vxor.u32 %v1167, 2147483648
        %v1173 = vsel %vm1171, %v1166, %v1172
        %vm1174 = vcmp.eq.s32.totalorder %v1169, 2
        %v1175 = vxor.u32 %v1166, 2147483648
        %v1176 = vsel %vm1174, %v1175, %v1167
        %v1177 = vsel %vm1170, %v1173, %v1176
        %v1178 = vsel %vm1168, nan, %v1177
        %v1179 = vpack.c.bf16 %v765, %v661
        %v1180 = vpack.c.bf16 %v972, %v869
        %v1181 = vpack.c.bf16 %v1178, %v1075
        %v1182 = vpack.c.bf16 0.0, %v518
        %v1183 = vld [vmem:[%s2] sm:$0xf]
        %v1184 = vld [vmem:[%s2 + $0x4] sm:$0xf]
        %v1185 = vld [vmem:[%s2 + $0x8] sm:$0xf]
        %v1186 = vld [vmem:[%s2 + $0xc] sm:$0xf]
        %v1187 = vld [vmem:[%s2 + $0x10] sm:$0xf]
        %v1188 = vld [vmem:[%s2 + $0x14] sm:$0xf]
        %v1189 = vld [vmem:[%s2 + $0x18] sm:$0xf]
        %v1190 = vld [vmem:[%s2 + $0x1c] sm:$0xf]
        %v1191 = vld [vmem:[%s2 + $0x20] sm:$0xf]
        %v1192 = vld [vmem:[%s2 + $0x24] sm:$0xf]
        %v1193 = vld [vmem:[%s2 + $0x28] sm:$0xf]
        %v1194 = vld [vmem:[%s2 + $0x2c] sm:$0xf]
        %v1195 = vld [vmem:[%s2 + $0x30] sm:$0xf]
        %v1196 = vld [vmem:[%s2 + $0x34] sm:$0xf]
        %v1197 = vld [vmem:[%s2 + $0x38] sm:$0xf]
        %v1198 = vld [vmem:[%s2 + $0x3c] sm:$0xf]
        %v1199 = vld [vmem:[%s3] sm:$0xff]
        %v1200 = vld [vmem:[%s3 + $0x8] sm:$0xff]
        %v1201 = vld [vmem:[%s3 + $0x10] sm:$0xff]
        %v1202 = vld [vmem:[%s3 + $0x18] sm:$0xff]
        %v1203 = vld [vmem:[%s3 + $0x20] sm:$0xff]
        %v1204 = vld [vmem:[%s3 + $0x28] sm:$0xff]
        %v1205 = vld [vmem:[%s3 + $0x30] sm:$0xff]
        %v1206 = vld [vmem:[%s3 + $0x38] sm:$0xff]
        %v1207 = vld [vmem:[%s3 + $0x40] sm:$0xff]
        %v1208 = vld [vmem:[%s3 + $0x48] sm:$0xff]
        %v1209 = vld [vmem:[%s3 + $0x50] sm:$0xff]
        %v1210 = vld [vmem:[%s3 + $0x58] sm:$0xff]
        %v1211 = vld [vmem:[%s3 + $0x60] sm:$0xff]
        %v1212 = vld [vmem:[%s3 + $0x68] sm:$0xff]
        %v1213 = vld [vmem:[%s3 + $0x70] sm:$0xff]
        %v1214 = vld [vmem:[%s3 + $0x78] sm:$0xff]
        %1216 = vset.pattern.permute.xlu0 0
        %1217 = vperm.xlu0 %1216, %v1199
        %v1218 = vpop.permute.xlu0 %1217
        %1221 = vset.pattern.permute.xlu0 0
        %1222 = vperm.xlu0 %1221, %v1200
        %v1223 = vpop.permute.xlu0 %1222
        %1226 = vset.pattern.permute.xlu0 0
        %1227 = vperm.xlu0 %1226, %v1201
        %v1228 = vpop.permute.xlu0 %1227
        %1231 = vset.pattern.permute.xlu0 0
        %1232 = vperm.xlu0 %1231, %v1202
        %v1233 = vpop.permute.xlu0 %1232
        %1236 = vset.pattern.permute.xlu0 0
        %1237 = vperm.xlu0 %1236, %v1203
        %v1238 = vpop.permute.xlu0 %1237
        %1241 = vset.pattern.permute.xlu0 0
        %1242 = vperm.xlu0 %1241, %v1204
        %v1243 = vpop.permute.xlu0 %1242
        %1246 = vset.pattern.permute.xlu0 0
        %1247 = vperm.xlu0 %1246, %v1205
        %v1248 = vpop.permute.xlu0 %1247
        %1251 = vset.pattern.permute.xlu0 0
        %1252 = vperm.xlu0 %1251, %v1206
        %v1253 = vpop.permute.xlu0 %1252
        %1256 = vset.pattern.permute.xlu0 0
        %1257 = vperm.xlu0 %1256, %v1207
        %v1258 = vpop.permute.xlu0 %1257
        %1261 = vset.pattern.permute.xlu0 0
        %1262 = vperm.xlu0 %1261, %v1208
        %v1263 = vpop.permute.xlu0 %1262
        %1266 = vset.pattern.permute.xlu0 0
        %1267 = vperm.xlu0 %1266, %v1209
        %v1268 = vpop.permute.xlu0 %1267
        %1271 = vset.pattern.permute.xlu0 0
        %1272 = vperm.xlu0 %1271, %v1210
        %v1273 = vpop.permute.xlu0 %1272
        %1276 = vset.pattern.permute.xlu0 0
        %1277 = vperm.xlu0 %1276, %v1211
        %v1278 = vpop.permute.xlu0 %1277
        %1281 = vset.pattern.permute.xlu0 0
        %1282 = vperm.xlu0 %1281, %v1212
        %v1283 = vpop.permute.xlu0 %1282
        %1286 = vset.pattern.permute.xlu0 0
        %1287 = vperm.xlu0 %1286, %v1213
        %v1288 = vpop.permute.xlu0 %1287
        %1291 = vset.pattern.permute.xlu0 0
        %1292 = vperm.xlu0 %1291, %v1214
        %v1293 = vpop.permute.xlu0 %1292
        %v1311 = vunpack.c.l.b16 %v1183
        %v1312 = vunpack.c.l.b16 %v1184
        %v1313 = vunpack.c.l.b16 %v1185
        %v1314 = vunpack.c.l.b16 %v1186
        %v1315 = vunpack.c.l.b16 %v1187
        %v1316 = vunpack.c.l.b16 %v1188
        %v1317 = vunpack.c.l.b16 %v1189
        %v1318 = vunpack.c.l.b16 %v1190
        %v1319 = vunpack.c.l.b16 %v1191
        %v1320 = vunpack.c.l.b16 %v1192
        %v1321 = vunpack.c.l.b16 %v1193
        %v1322 = vunpack.c.l.b16 %v1194
        %v1323 = vunpack.c.l.b16 %v1195
        %v1324 = vunpack.c.l.b16 %v1196
        %v1325 = vunpack.c.l.b16 %v1197
        %v1326 = vunpack.c.l.b16 %v1198
        %v1327 = vpack.c.b16 %v1312, %v1311
        %v1328 = vpack.c.b16 %v1314, %v1313
        %v1329 = vpack.c.b16 %v1316, %v1315
        %v1330 = vpack.c.b16 %v1318, %v1317
        %v1331 = vpack.c.b16 %v1320, %v1319
        %v1332 = vpack.c.b16 %v1322, %v1321
        %v1333 = vpack.c.b16 %v1324, %v1323
        %v1334 = vpack.c.b16 %v1326, %v1325
        %vm1335 = vcmask 523264
        %v1337 = vsel %vm1335, %v1327, 0
        %v1340 = vsel %vm1335, %v1328, 0
        %v1343 = vsel %vm1335, %v1329, 0
        %v1346 = vsel %vm1335, %v1330, 0
        %v1349 = vsel %vm1335, %v1331, 0
        %v1352 = vsel %vm1335, %v1332, 0
        %v1355 = vsel %vm1335, %v1333, 0
        %v1358 = vsel %vm1335, %v1334, 0
        %1360 = vmatprep.subr.bf16.mxu0 0
        %1361 = vmatpush1.bf16.msra.mxu0 0
        %1362 = vmatprep.subr.bf16.mxu0 0
        %1363 = vmatpush1.bf16.msra.mxu0 0
        %1364 = vmatprep.subr.bf16.mxu0 0
        %1365 = vmatpush1.bf16.msra.mxu0 0
        %1366 = vmatprep.subr.bf16.mxu0 0
        %1367 = vmatpush1.bf16.msra.mxu0 0
        %1368 = vmatprep.subr.bf16.mxu0 0
        %1369 = vmatpush1.bf16.msra.mxu0 %v1182
        %1370 = vmatprep.subr.bf16.mxu0 0
        %1371 = vmatpush1.bf16.msra.mxu0 %v1181
        %1372 = vmatprep.subr.bf16.mxu0 0
        %1373 = vmatpush1.bf16.msra.mxu0 %v1180
        %1374 = vmatprep.subr.bf16.mxu0 0
        %1375 = vmatpush1.bf16.msra.mxu0 %v1179
        %1376 = vmatprep.subr.bf16.mxu0 0
        %1377 = vmatpush2.bf16.msra.mxu0 0
        %1378 = vmatprep.subr.bf16.mxu0 0
        %1379 = vmatpush2.bf16.msra.mxu0 0
        %1380 = vmatprep.subr.bf16.mxu0 0
        %1381 = vmatpush2.bf16.msra.mxu0 0
        %1382 = vmatprep.subr.bf16.mxu0 0
        %1383 = vmatpush2.bf16.msra.mxu0 0
        %1384 = vmatprep.subr.bf16.mxu0 0
        %1385 = vmatpush2.bf16.msra.mxu0 0
        %1386 = vmatprep.subr.bf16.mxu0 0
        %1387 = vmatpush2.bf16.msra.mxu0 0
        %1388 = vmatprep.subr.bf16.mxu0 0
        %1389 = vmatpush2.bf16.msra.mxu0 0
        %1390 = vmatprep.subr.bf16.mxu0 0
        %1391 = vmatpush2.bf16.msra.mxu0 0
        %1392 = vmatprep.mubr.bf16.mxu0 0
        %1393 = vmatmul.mubr.bf16.gmra.mxu0 %v1337
        %v1394 = vpop.f32.mrf.mxu0
        %v1395 = vadd.f32 %v1218, %v1394
        %v1396 = vpop.f32.mrf.mxu0
        %v1397 = vpop.f32.mrf.mxu0
        %v1398 = vadd.f32 %v1223, %v1397
        %v1399 = vpop.f32.mrf.mxu0
        %1400 = vmatprep.mubr.bf16.mxu0 0
        %1401 = vmatmul.mubr.bf16.gmra.mxu0 %v1340
        %v1402 = vpop.f32.mrf.mxu0
        %v1403 = vadd.f32 %v1228, %v1402
        %v1404 = vpop.f32.mrf.mxu0
        %v1405 = vpop.f32.mrf.mxu0
        %v1406 = vadd.f32 %v1233, %v1405
        %v1407 = vpop.f32.mrf.mxu0
        %1408 = vmatprep.mubr.bf16.mxu0 0
        %1409 = vmatmul.mubr.bf16.gmra.mxu0 %v1343
        %v1410 = vpop.f32.mrf.mxu0
        %v1411 = vadd.f32 %v1238, %v1410
        %v1412 = vpop.f32.mrf.mxu0
        %v1413 = vpop.f32.mrf.mxu0
        %v1414 = vadd.f32 %v1243, %v1413
        %v1415 = vpop.f32.mrf.mxu0
        %1416 = vmatprep.mubr.bf16.mxu0 0
        %1417 = vmatmul.mubr.bf16.gmra.mxu0 %v1346
        %v1418 = vpop.f32.mrf.mxu0
        %v1419 = vadd.f32 %v1248, %v1418
        %v1420 = vpop.f32.mrf.mxu0
        %v1421 = vpop.f32.mrf.mxu0
        %v1422 = vadd.f32 %v1253, %v1421
        %v1423 = vpop.f32.mrf.mxu0
        %1424 = vmatprep.mubr.bf16.mxu0 0
        %1425 = vmatmul.mubr.bf16.gmra.mxu0 %v1349
        %v1426 = vpop.f32.mrf.mxu0
        %v1427 = vadd.f32 %v1258, %v1426
        %v1428 = vpop.f32.mrf.mxu0
        %v1429 = vpop.f32.mrf.mxu0
        %v1430 = vadd.f32 %v1263, %v1429
        %v1431 = vpop.f32.mrf.mxu0
        %1432 = vmatprep.mubr.bf16.mxu0 0
        %1433 = vmatmul.mubr.bf16.gmra.mxu0 %v1352
        %v1434 = vpop.f32.mrf.mxu0
        %v1435 = vadd.f32 %v1268, %v1434
        %v1436 = vpop.f32.mrf.mxu0
        %v1437 = vpop.f32.mrf.mxu0
        %v1438 = vadd.f32 %v1273, %v1437
        %v1439 = vpop.f32.mrf.mxu0
        %1440 = vmatprep.mubr.bf16.mxu0 0
        %1441 = vmatmul.mubr.bf16.gmra.mxu0 %v1355
        %v1442 = vpop.f32.mrf.mxu0
        %v1443 = vadd.f32 %v1278, %v1442
        %v1444 = vpop.f32.mrf.mxu0
        %v1445 = vpop.f32.mrf.mxu0
        %v1446 = vadd.f32 %v1283, %v1445
        %v1447 = vpop.f32.mrf.mxu0
        %1448 = vmatprep.mubr.bf16.mxu0 0
        %1449 = vmatmul.mubr.bf16.gmra.mxu0 %v1358
        %v1450 = vpop.f32.mrf.mxu0
        %v1451 = vadd.f32 %v1288, %v1450
        %v1452 = vpop.f32.mrf.mxu0
        %v1453 = vpop.f32.mrf.mxu0
        %v1454 = vadd.f32 %v1293, %v1453
        %v1455 = vpop.f32.mrf.mxu0
        %1456 = vdwg.mxu0
        %v1457 = vmax.f32 %v1395, 0.0
        %v1458 = vmax.f32 %v1398, 0.0
        %v1459 = vmax.f32 %v1403, 0.0
        %v1460 = vmax.f32 %v1406, 0.0
        %v1461 = vmax.f32 %v1411, 0.0
        %v1462 = vmax.f32 %v1414, 0.0
        %v1463 = vmax.f32 %v1419, 0.0
        %v1464 = vmax.f32 %v1422, 0.0
        %v1465 = vmax.f32 %v1427, 0.0
        %v1466 = vmax.f32 %v1430, 0.0
        %v1467 = vmax.f32 %v1435, 0.0
        %v1468 = vmax.f32 %v1438, 0.0
        %v1469 = vmax.f32 %v1443, 0.0
        %v1470 = vmax.f32 %v1446, 0.0
        %v1471 = vmax.f32 %v1451, 0.0
        %v1472 = vmax.f32 %v1454, 0.0
        %v1473 = vpack.c.bf16 %v1458, %v1457
        %v1474 = vpack.c.bf16 %v1460, %v1459
        %v1475 = vpack.c.bf16 %v1462, %v1461
        %v1476 = vpack.c.bf16 %v1464, %v1463
        %v1477 = vpack.c.bf16 %v1466, %v1465
        %v1478 = vpack.c.bf16 %v1468, %v1467
        %v1479 = vpack.c.bf16 %v1470, %v1469
        %v1480 = vpack.c.bf16 %v1472, %v1471
        %v1481 = vld [vmem:[%s4] sm:$0xf]
        %v1482 = vld [vmem:[%s4 + $0x4] sm:$0xf]
        %v1483 = vld [vmem:[%s4 + $0x8] sm:$0xf]
        %v1484 = vld [vmem:[%s4 + $0xc] sm:$0xf]
        %v1485 = vld [vmem:[%s4 + $0x10] sm:$0xf]
        %v1486 = vld [vmem:[%s4 + $0x14] sm:$0xf]
        %v1487 = vld [vmem:[%s4 + $0x18] sm:$0xf]
        %v1488 = vld [vmem:[%s4 + $0x1c] sm:$0xf]
        %v1489 = vld [vmem:[%s4 + $0x20] sm:$0xf]
        %v1490 = vld [vmem:[%s4 + $0x24] sm:$0xf]
        %v1491 = vld [vmem:[%s4 + $0x28] sm:$0xf]
        %v1492 = vld [vmem:[%s4 + $0x2c] sm:$0xf]
        %v1493 = vld [vmem:[%s4 + $0x30] sm:$0xf]
        %v1494 = vld [vmem:[%s4 + $0x34] sm:$0xf]
        %v1495 = vld [vmem:[%s4 + $0x38] sm:$0xf]
        %v1496 = vld [vmem:[%s4 + $0x3c] sm:$0xf]
        %v1497 = vld [vmem:[%s5] sm:$0xff]
        %v1498 = vld [vmem:[%s5 + $0x8] sm:$0xff]
        %v1499 = vld [vmem:[%s5 + $0x10] sm:$0xff]
        %v1500 = vld [vmem:[%s5 + $0x18] sm:$0xff]
        %v1501 = vld [vmem:[%s5 + $0x20] sm:$0xff]
        %v1502 = vld [vmem:[%s5 + $0x28] sm:$0xff]
        %v1503 = vld [vmem:[%s5 + $0x30] sm:$0xff]
        %v1504 = vld [vmem:[%s5 + $0x38] sm:$0xff]
        %v1505 = vld [vmem:[%s5 + $0x40] sm:$0xff]
        %v1506 = vld [vmem:[%s5 + $0x48] sm:$0xff]
        %v1507 = vld [vmem:[%s5 + $0x50] sm:$0xff]
        %v1508 = vld [vmem:[%s5 + $0x58] sm:$0xff]
        %v1509 = vld [vmem:[%s5 + $0x60] sm:$0xff]
        %v1510 = vld [vmem:[%s5 + $0x68] sm:$0xff]
        %v1511 = vld [vmem:[%s5 + $0x70] sm:$0xff]
        %v1512 = vld [vmem:[%s5 + $0x78] sm:$0xff]
        %1514 = vset.pattern.permute.xlu0 0
        %1515 = vperm.xlu0 %1514, %v1497
        %v1516 = vpop.permute.xlu0 %1515
        %1519 = vset.pattern.permute.xlu0 0
        %1520 = vperm.xlu0 %1519, %v1498
        %v1521 = vpop.permute.xlu0 %1520
        %1524 = vset.pattern.permute.xlu0 0
        %1525 = vperm.xlu0 %1524, %v1499
        %v1526 = vpop.permute.xlu0 %1525
        %1529 = vset.pattern.permute.xlu0 0
        %1530 = vperm.xlu0 %1529, %v1500
        %v1531 = vpop.permute.xlu0 %1530
        %1534 = vset.pattern.permute.xlu0 0
        %1535 = vperm.xlu0 %1534, %v1501
        %v1536 = vpop.permute.xlu0 %1535
        %1539 = vset.pattern.permute.xlu0 0
        %1540 = vperm.xlu0 %1539, %v1502
        %v1541 = vpop.permute.xlu0 %1540
        %1544 = vset.pattern.permute.xlu0 0
        %1545 = vperm.xlu0 %1544, %v1503
        %v1546 = vpop.permute.xlu0 %1545
        %1549 = vset.pattern.permute.xlu0 0
        %1550 = vperm.xlu0 %1549, %v1504
        %v1551 = vpop.permute.xlu0 %1550
        %1554 = vset.pattern.permute.xlu0 0
        %1555 = vperm.xlu0 %1554, %v1505
        %v1556 = vpop.permute.xlu0 %1555
        %1559 = vset.pattern.permute.xlu0 0
        %1560 = vperm.xlu0 %1559, %v1506
        %v1561 = vpop.permute.xlu0 %1560
        %1564 = vset.pattern.permute.xlu0 0
        %1565 = vperm.xlu0 %1564, %v1507
        %v1566 = vpop.permute.xlu0 %1565
        %1569 = vset.pattern.permute.xlu0 0
        %1570 = vperm.xlu0 %1569, %v1508
        %v1571 = vpop.permute.xlu0 %1570
        %1574 = vset.pattern.permute.xlu0 0
        %1575 = vperm.xlu0 %1574, %v1509
        %v1576 = vpop.permute.xlu0 %1575
        %1579 = vset.pattern.permute.xlu0 0
        %1580 = vperm.xlu0 %1579, %v1510
        %v1581 = vpop.permute.xlu0 %1580
        %1584 = vset.pattern.permute.xlu0 0
        %1585 = vperm.xlu0 %1584, %v1511
        %v1586 = vpop.permute.xlu0 %1585
        %1589 = vset.pattern.permute.xlu0 0
        %1590 = vperm.xlu0 %1589, %v1512
        %v1591 = vpop.permute.xlu0 %1590
        %v1609 = vunpack.c.l.b16 %v1481
        %v1610 = vunpack.c.l.b16 %v1482
        %v1611 = vunpack.c.l.b16 %v1483
        %v1612 = vunpack.c.l.b16 %v1484
        %v1613 = vunpack.c.l.b16 %v1485
        %v1614 = vunpack.c.l.b16 %v1486
        %v1615 = vunpack.c.l.b16 %v1487
        %v1616 = vunpack.c.l.b16 %v1488
        %v1617 = vunpack.c.l.b16 %v1489
        %v1618 = vunpack.c.l.b16 %v1490
        %v1619 = vunpack.c.l.b16 %v1491
        %v1620 = vunpack.c.l.b16 %v1492
        %v1621 = vunpack.c.l.b16 %v1493
        %v1622 = vunpack.c.l.b16 %v1494
        %v1623 = vunpack.c.l.b16 %v1495
        %v1624 = vunpack.c.l.b16 %v1496
        %v1625 = vpack.c.b16 %v1610, %v1609
        %v1626 = vpack.c.b16 %v1612, %v1611
        %v1627 = vpack.c.b16 %v1614, %v1613
        %v1628 = vpack.c.b16 %v1616, %v1615
        %v1629 = vpack.c.b16 %v1618, %v1617
        %v1630 = vpack.c.b16 %v1620, %v1619
        %v1631 = vpack.c.b16 %v1622, %v1621
        %v1632 = vpack.c.b16 %v1624, %v1623
        %1641 = vmatprep.subr.bf16.mxu0 0
        %1642 = vmatpush1.bf16.msra.mxu0 %v1480
        %1643 = vmatprep.subr.bf16.mxu0 0
        %1644 = vmatpush1.bf16.msra.mxu0 %v1479
        %1645 = vmatprep.subr.bf16.mxu0 0
        %1646 = vmatpush1.bf16.msra.mxu0 %v1478
        %1647 = vmatprep.subr.bf16.mxu0 0
        %1648 = vmatpush1.bf16.msra.mxu0 %v1477
        %1649 = vmatprep.subr.bf16.mxu0 0
        %1650 = vmatpush1.bf16.msra.mxu0 %v1476
        %1651 = vmatprep.subr.bf16.mxu0 0
        %1652 = vmatpush1.bf16.msra.mxu0 %v1475
        %1653 = vmatprep.subr.bf16.mxu0 0
        %1654 = vmatpush1.bf16.msra.mxu0 %v1474
        %1655 = vmatprep.subr.bf16.mxu0 0
        %1656 = vmatpush1.bf16.msra.mxu0 %v1473
        %1657 = vmatprep.subr.bf16.mxu0 0
        %1658 = vmatpush2.bf16.msra.mxu0 0
        %1659 = vmatprep.subr.bf16.mxu0 0
        %1660 = vmatpush2.bf16.msra.mxu0 0
        %1661 = vmatprep.subr.bf16.mxu0 0
        %1662 = vmatpush2.bf16.msra.mxu0 0
        %1663 = vmatprep.subr.bf16.mxu0 0
        %1664 = vmatpush2.bf16.msra.mxu0 0
        %1665 = vmatprep.subr.bf16.mxu0 0
        %1666 = vmatpush2.bf16.msra.mxu0 0
        %1667 = vmatprep.subr.bf16.mxu0 0
        %1668 = vmatpush2.bf16.msra.mxu0 0
        %1669 = vmatprep.subr.bf16.mxu0 0
        %1670 = vmatpush2.bf16.msra.mxu0 0
        %1671 = vmatprep.subr.bf16.mxu0 0
        %1672 = vmatpush2.bf16.msra.mxu0 0
        %1673 = vmatprep.mubr.bf16.mxu0 0
        %1674 = vmatmul.mubr.bf16.gmra.mxu0 %v1625
        %v1675 = vpop.f32.mrf.mxu0
        %v1676 = vadd.f32 %v1516, %v1675
        %v1677 = vpop.f32.mrf.mxu0
        %v1678 = vpop.f32.mrf.mxu0
        %v1679 = vadd.f32 %v1521, %v1678
        %v1680 = vpop.f32.mrf.mxu0
        %1681 = vmatprep.mubr.bf16.mxu0 0
        %1682 = vmatmul.mubr.bf16.gmra.mxu0 %v1626
        %v1683 = vpop.f32.mrf.mxu0
        %v1684 = vadd.f32 %v1526, %v1683
        %v1685 = vpop.f32.mrf.mxu0
        %v1686 = vpop.f32.mrf.mxu0
        %v1687 = vadd.f32 %v1531, %v1686
        %v1688 = vpop.f32.mrf.mxu0
        %1689 = vmatprep.mubr.bf16.mxu0 0
        %1690 = vmatmul.mubr.bf16.gmra.mxu0 %v1627
        %v1691 = vpop.f32.mrf.mxu0
        %v1692 = vadd.f32 %v1536, %v1691
        %v1693 = vpop.f32.mrf.mxu0
        %v1694 = vpop.f32.mrf.mxu0
        %v1695 = vadd.f32 %v1541, %v1694
        %v1696 = vpop.f32.mrf.mxu0
        %1697 = vmatprep.mubr.bf16.mxu0 0
        %1698 = vmatmul.mubr.bf16.gmra.mxu0 %v1628
        %v1699 = vpop.f32.mrf.mxu0
        %v1700 = vadd.f32 %v1546, %v1699
        %v1701 = vpop.f32.mrf.mxu0
        %v1702 = vpop.f32.mrf.mxu0
        %v1703 = vadd.f32 %v1551, %v1702
        %v1704 = vpop.f32.mrf.mxu0
        %1705 = vmatprep.mubr.bf16.mxu0 0
        %1706 = vmatmul.mubr.bf16.gmra.mxu0 %v1629
        %v1707 = vpop.f32.mrf.mxu0
        %v1708 = vadd.f32 %v1556, %v1707
        %v1709 = vpop.f32.mrf.mxu0
        %v1710 = vpop.f32.mrf.mxu0
        %v1711 = vadd.f32 %v1561, %v1710
        %v1712 = vpop.f32.mrf.mxu0
        %1713 = vmatprep.mubr.bf16.mxu0 0
        %1714 = vmatmul.mubr.bf16.gmra.mxu0 %v1630
        %v1715 = vpop.f32.mrf.mxu0
        %v1716 = vadd.f32 %v1566, %v1715
        %v1717 = vpop.f32.mrf.mxu0
        %v1718 = vpop.f32.mrf.mxu0
        %v1719 = vadd.f32 %v1571, %v1718
        %v1720 = vpop.f32.mrf.mxu0
        %1721 = vmatprep.mubr.bf16.mxu0 0
        %1722 = vmatmul.mubr.bf16.gmra.mxu0 %v1631
        %v1723 = vpop.f32.mrf.mxu0
        %v1724 = vadd.f32 %v1576, %v1723
        %v1725 = vpop.f32.mrf.mxu0
        %v1726 = vpop.f32.mrf.mxu0
        %v1727 = vadd.f32 %v1581, %v1726
        %v1728 = vpop.f32.mrf.mxu0
        %1729 = vmatprep.mubr.bf16.mxu0 0
        %1730 = vmatmul.mubr.bf16.gmra.mxu0 %v1632
        %v1731 = vpop.f32.mrf.mxu0
        %v1732 = vadd.f32 %v1586, %v1731
        %v1733 = vpop.f32.mrf.mxu0
        %v1734 = vpop.f32.mrf.mxu0
        %v1735 = vadd.f32 %v1591, %v1734
        %v1736 = vpop.f32.mrf.mxu0
        %1737 = vdwg.mxu0
        %v1738 = vmax.f32 %v1676, 0.0
        %v1739 = vmax.f32 %v1679, 0.0
        %v1740 = vmax.f32 %v1684, 0.0
        %v1741 = vmax.f32 %v1687, 0.0
        %v1742 = vmax.f32 %v1692, 0.0
        %v1743 = vmax.f32 %v1695, 0.0
        %v1744 = vmax.f32 %v1700, 0.0
        %v1745 = vmax.f32 %v1703, 0.0
        %v1746 = vmax.f32 %v1708, 0.0
        %v1747 = vmax.f32 %v1711, 0.0
        %v1748 = vmax.f32 %v1716, 0.0
        %v1749 = vmax.f32 %v1719, 0.0
        %v1750 = vmax.f32 %v1724, 0.0
        %v1751 = vmax.f32 %v1727, 0.0
        %v1752 = vmax.f32 %v1732, 0.0
        %v1753 = vmax.f32 %v1735, 0.0
        %v1754 = vpack.c.bf16 %v1739, %v1738
        %v1755 = vpack.c.bf16 %v1741, %v1740
        %v1756 = vpack.c.bf16 %v1743, %v1742
        %v1757 = vpack.c.bf16 %v1745, %v1744
        %v1758 = vpack.c.bf16 %v1747, %v1746
        %v1759 = vpack.c.bf16 %v1749, %v1748
        %v1760 = vpack.c.bf16 %v1751, %v1750
        %v1761 = vpack.c.bf16 %v1753, %v1752
        %v1762 = vld [vmem:[%s6] sm:$0xf]
        %v1763 = vld [vmem:[%s6 + $0x4] sm:$0xf]
        %v1764 = vld [vmem:[%s6 + $0x8] sm:$0xf]
        %v1765 = vld [vmem:[%s6 + $0xc] sm:$0xf]
        %v1766 = vld [vmem:[%s6 + $0x10] sm:$0xf]
        %v1767 = vld [vmem:[%s6 + $0x14] sm:$0xf]
        %v1768 = vld [vmem:[%s6 + $0x18] sm:$0xf]
        %v1769 = vld [vmem:[%s6 + $0x1c] sm:$0xf]
        %v1770 = vld [vmem:[%s6 + $0x20] sm:$0xf]
        %v1771 = vld [vmem:[%s6 + $0x24] sm:$0xf]
        %v1772 = vld [vmem:[%s6 + $0x28] sm:$0xf]
        %v1773 = vld [vmem:[%s6 + $0x2c] sm:$0xf]
        %v1774 = vld [vmem:[%s6 + $0x30] sm:$0xf]
        %v1775 = vld [vmem:[%s6 + $0x34] sm:$0xf]
        %v1776 = vld [vmem:[%s6 + $0x38] sm:$0xf]
        %v1777 = vld [vmem:[%s6 + $0x3c] sm:$0xf]
        %v1778 = vld [vmem:[%s7] sm:$0xff]
        %v1779 = vld [vmem:[%s7 + $0x8] sm:$0xff]
        %v1780 = vld [vmem:[%s7 + $0x10] sm:$0xff]
        %v1781 = vld [vmem:[%s7 + $0x18] sm:$0xff]
        %v1782 = vld [vmem:[%s7 + $0x20] sm:$0xff]
        %v1783 = vld [vmem:[%s7 + $0x28] sm:$0xff]
        %v1784 = vld [vmem:[%s7 + $0x30] sm:$0xff]
        %v1785 = vld [vmem:[%s7 + $0x38] sm:$0xff]
        %v1786 = vld [vmem:[%s7 + $0x40] sm:$0xff]
        %v1787 = vld [vmem:[%s7 + $0x48] sm:$0xff]
        %v1788 = vld [vmem:[%s7 + $0x50] sm:$0xff]
        %v1789 = vld [vmem:[%s7 + $0x58] sm:$0xff]
        %v1790 = vld [vmem:[%s7 + $0x60] sm:$0xff]
        %v1791 = vld [vmem:[%s7 + $0x68] sm:$0xff]
        %v1792 = vld [vmem:[%s7 + $0x70] sm:$0xff]
        %v1793 = vld [vmem:[%s7 + $0x78] sm:$0xff]
        %1795 = vset.pattern.permute.xlu0 0
        %1796 = vperm.xlu0 %1795, %v1778
        %v1797 = vpop.permute.xlu0 %1796
        %1800 = vset.pattern.permute.xlu0 0
        %1801 = vperm.xlu0 %1800, %v1779
        %v1802 = vpop.permute.xlu0 %1801
        %1805 = vset.pattern.permute.xlu0 0
        %1806 = vperm.xlu0 %1805, %v1780
        %v1807 = vpop.permute.xlu0 %1806
        %1810 = vset.pattern.permute.xlu0 0
        %1811 = vperm.xlu0 %1810, %v1781
        %v1812 = vpop.permute.xlu0 %1811
        %1815 = vset.pattern.permute.xlu0 0
        %1816 = vperm.xlu0 %1815, %v1782
        %v1817 = vpop.permute.xlu0 %1816
        %1820 = vset.pattern.permute.xlu0 0
        %1821 = vperm.xlu0 %1820, %v1783
        %v1822 = vpop.permute.xlu0 %1821
        %1825 = vset.pattern.permute.xlu0 0
        %1826 = vperm.xlu0 %1825, %v1784
        %v1827 = vpop.permute.xlu0 %1826
        %1830 = vset.pattern.permute.xlu0 0
        %1831 = vperm.xlu0 %1830, %v1785
        %v1832 = vpop.permute.xlu0 %1831
        %1835 = vset.pattern.permute.xlu0 0
        %1836 = vperm.xlu0 %1835, %v1786
        %v1837 = vpop.permute.xlu0 %1836
        %1840 = vset.pattern.permute.xlu0 0
        %1841 = vperm.xlu0 %1840, %v1787
        %v1842 = vpop.permute.xlu0 %1841
        %1845 = vset.pattern.permute.xlu0 0
        %1846 = vperm.xlu0 %1845, %v1788
        %v1847 = vpop.permute.xlu0 %1846
        %1850 = vset.pattern.permute.xlu0 0
        %1851 = vperm.xlu0 %1850, %v1789
        %v1852 = vpop.permute.xlu0 %1851
        %1855 = vset.pattern.permute.xlu0 0
        %1856 = vperm.xlu0 %1855, %v1790
        %v1857 = vpop.permute.xlu0 %1856
        %1860 = vset.pattern.permute.xlu0 0
        %1861 = vperm.xlu0 %1860, %v1791
        %v1862 = vpop.permute.xlu0 %1861
        %1865 = vset.pattern.permute.xlu0 0
        %1866 = vperm.xlu0 %1865, %v1792
        %v1867 = vpop.permute.xlu0 %1866
        %1870 = vset.pattern.permute.xlu0 0
        %1871 = vperm.xlu0 %1870, %v1793
        %v1872 = vpop.permute.xlu0 %1871
        %v1890 = vunpack.c.l.b16 %v1762
        %v1891 = vunpack.c.l.b16 %v1763
        %v1892 = vunpack.c.l.b16 %v1764
        %v1893 = vunpack.c.l.b16 %v1765
        %v1894 = vunpack.c.l.b16 %v1766
        %v1895 = vunpack.c.l.b16 %v1767
        %v1896 = vunpack.c.l.b16 %v1768
        %v1897 = vunpack.c.l.b16 %v1769
        %v1898 = vunpack.c.l.b16 %v1770
        %v1899 = vunpack.c.l.b16 %v1771
        %v1900 = vunpack.c.l.b16 %v1772
        %v1901 = vunpack.c.l.b16 %v1773
        %v1902 = vunpack.c.l.b16 %v1774
        %v1903 = vunpack.c.l.b16 %v1775
        %v1904 = vunpack.c.l.b16 %v1776
        %v1905 = vunpack.c.l.b16 %v1777
        %v1906 = vpack.c.b16 %v1891, %v1890
        %v1907 = vpack.c.b16 %v1893, %v1892
        %v1908 = vpack.c.b16 %v1895, %v1894
        %v1909 = vpack.c.b16 %v1897, %v1896
        %v1910 = vpack.c.b16 %v1899, %v1898
        %v1911 = vpack.c.b16 %v1901, %v1900
        %v1912 = vpack.c.b16 %v1903, %v1902
        %v1913 = vpack.c.b16 %v1905, %v1904
        %1922 = vmatprep.subr.bf16.mxu0 0
        %1923 = vmatpush1.bf16.msra.mxu0 %v1761
        %1924 = vmatprep.subr.bf16.mxu0 0
        %1925 = vmatpush1.bf16.msra.mxu0 %v1760
        %1926 = vmatprep.subr.bf16.mxu0 0
        %1927 = vmatpush1.bf16.msra.mxu0 %v1759
        %1928 = vmatprep.subr.bf16.mxu0 0
        %1929 = vmatpush1.bf16.msra.mxu0 %v1758
        %1930 = vmatprep.subr.bf16.mxu0 0
        %1931 = vmatpush1.bf16.msra.mxu0 %v1757
        %1932 = vmatprep.subr.bf16.mxu0 0
        %1933 = vmatpush1.bf16.msra.mxu0 %v1756
        %1934 = vmatprep.subr.bf16.mxu0 0
        %1935 = vmatpush1.bf16.msra.mxu0 %v1755
        %1936 = vmatprep.subr.bf16.mxu0 0
        %1937 = vmatpush1.bf16.msra.mxu0 %v1754
        %1938 = vmatprep.subr.bf16.mxu0 0
        %1939 = vmatpush2.bf16.msra.mxu0 0
        %1940 = vmatprep.subr.bf16.mxu0 0
        %1941 = vmatpush2.bf16.msra.mxu0 0
        %1942 = vmatprep.subr.bf16.mxu0 0
        %1943 = vmatpush2.bf16.msra.mxu0 0
        %1944 = vmatprep.subr.bf16.mxu0 0
        %1945 = vmatpush2.bf16.msra.mxu0 0
        %1946 = vmatprep.subr.bf16.mxu0 0
        %1947 = vmatpush2.bf16.msra.mxu0 0
        %1948 = vmatprep.subr.bf16.mxu0 0
        %1949 = vmatpush2.bf16.msra.mxu0 0
        %1950 = vmatprep.subr.bf16.mxu0 0
        %1951 = vmatpush2.bf16.msra.mxu0 0
        %1952 = vmatprep.subr.bf16.mxu0 0
        %1953 = vmatpush2.bf16.msra.mxu0 0
        %1954 = vmatprep.mubr.bf16.mxu0 0
        %1955 = vmatmul.mubr.bf16.gmra.mxu0 %v1906
        %v1956 = vpop.f32.mrf.mxu0
        %v1957 = vadd.f32 %v1797, %v1956
        %v1958 = vpop.f32.mrf.mxu0
        %v1959 = vpop.f32.mrf.mxu0
        %v1960 = vadd.f32 %v1802, %v1959
        %v1961 = vpop.f32.mrf.mxu0
        %1962 = vmatprep.mubr.bf16.mxu0 0
        %1963 = vmatmul.mubr.bf16.gmra.mxu0 %v1907
        %v1964 = vpop.f32.mrf.mxu0
        %v1965 = vadd.f32 %v1807, %v1964
        %v1966 = vpop.f32.mrf.mxu0
        %v1967 = vpop.f32.mrf.mxu0
        %v1968 = vadd.f32 %v1812, %v1967
        %v1969 = vpop.f32.mrf.mxu0
        %1970 = vmatprep.mubr.bf16.mxu0 0
        %1971 = vmatmul.mubr.bf16.gmra.mxu0 %v1908
        %v1972 = vpop.f32.mrf.mxu0
        %v1973 = vadd.f32 %v1817, %v1972
        %v1974 = vpop.f32.mrf.mxu0
        %v1975 = vpop.f32.mrf.mxu0
        %v1976 = vadd.f32 %v1822, %v1975
        %v1977 = vpop.f32.mrf.mxu0
        %1978 = vmatprep.mubr.bf16.mxu0 0
        %1979 = vmatmul.mubr.bf16.gmra.mxu0 %v1909
        %v1980 = vpop.f32.mrf.mxu0
        %v1981 = vadd.f32 %v1827, %v1980
        %v1982 = vpop.f32.mrf.mxu0
        %v1983 = vpop.f32.mrf.mxu0
        %v1984 = vadd.f32 %v1832, %v1983
        %v1985 = vpop.f32.mrf.mxu0
        %1986 = vmatprep.mubr.bf16.mxu0 0
        %1987 = vmatmul.mubr.bf16.gmra.mxu0 %v1910
        %v1988 = vpop.f32.mrf.mxu0
        %v1989 = vadd.f32 %v1837, %v1988
        %v1990 = vpop.f32.mrf.mxu0
        %v1991 = vpop.f32.mrf.mxu0
        %v1992 = vadd.f32 %v1842, %v1991
        %v1993 = vpop.f32.mrf.mxu0
        %1994 = vmatprep.mubr.bf16.mxu0 0
        %1995 = vmatmul.mubr.bf16.gmra.mxu0 %v1911
        %v1996 = vpop.f32.mrf.mxu0
        %v1997 = vadd.f32 %v1847, %v1996
        %v1998 = vpop.f32.mrf.mxu0
        %v1999 = vpop.f32.mrf.mxu0
        %v2000 = vadd.f32 %v1852, %v1999
        %v2001 = vpop.f32.mrf.mxu0
        %2002 = vmatprep.mubr.bf16.mxu0 0
        %2003 = vmatmul.mubr.bf16.gmra.mxu0 %v1912
        %v2004 = vpop.f32.mrf.mxu0
        %v2005 = vadd.f32 %v1857, %v2004
        %v2006 = vpop.f32.mrf.mxu0
        %v2007 = vpop.f32.mrf.mxu0
        %v2008 = vadd.f32 %v1862, %v2007
        %v2009 = vpop.f32.mrf.mxu0
        %2010 = vmatprep.mubr.bf16.mxu0 0
        %2011 = vmatmul.mubr.bf16.gmra.mxu0 %v1913
        %v2012 = vpop.f32.mrf.mxu0
        %v2013 = vadd.f32 %v1867, %v2012
        %v2014 = vpop.f32.mrf.mxu0
        %v2015 = vpop.f32.mrf.mxu0
        %v2016 = vadd.f32 %v1872, %v2015
        %v2017 = vpop.f32.mrf.mxu0
        %2018 = vdwg.mxu0
        %v2019 = vmax.f32 %v1957, 0.0
        %v2020 = vmax.f32 %v1960, 0.0
        %v2021 = vmax.f32 %v1965, 0.0
        %v2022 = vmax.f32 %v1968, 0.0
        %v2023 = vmax.f32 %v1973, 0.0
        %v2024 = vmax.f32 %v1976, 0.0
        %v2025 = vmax.f32 %v1981, 0.0
        %v2026 = vmax.f32 %v1984, 0.0
        %v2027 = vmax.f32 %v1989, 0.0
        %v2028 = vmax.f32 %v1992, 0.0
        %v2029 = vmax.f32 %v1997, 0.0
        %v2030 = vmax.f32 %v2000, 0.0
        %v2031 = vmax.f32 %v2005, 0.0
        %v2032 = vmax.f32 %v2008, 0.0
        %v2033 = vmax.f32 %v2013, 0.0
        %v2034 = vmax.f32 %v2016, 0.0
        %v2035 = vpack.c.bf16 %v2020, %v2019
        %v2036 = vpack.c.bf16 %v2022, %v2021
        %v2037 = vpack.c.bf16 %v2024, %v2023
        %v2038 = vpack.c.bf16 %v2026, %v2025
        %v2039 = vpack.c.bf16 %v2028, %v2027
        %v2040 = vpack.c.bf16 %v2030, %v2029
        %v2041 = vpack.c.bf16 %v2032, %v2031
        %v2042 = vpack.c.bf16 %v2034, %v2033
        %v2043 = vld [vmem:[%s8] sm:$0xff]
        %v2044 = vld [vmem:[%s8 + $0x8] sm:$0xff]
        %v2045 = vld [vmem:[%s8 + $0x10] sm:$0xff]
        %v2046 = vld [vmem:[%s8 + $0x18] sm:$0xff]
        %v2047 = vld [vmem:[%s8 + $0x20] sm:$0xff]
        %v2048 = vld [vmem:[%s8 + $0x28] sm:$0xff]
        %v2049 = vld [vmem:[%s8 + $0x30] sm:$0xff]
        %v2050 = vld [vmem:[%s8 + $0x38] sm:$0xff]
        %v2051 = vld [vmem:[%s8 + $0x40] sm:$0xff]
        %v2052 = vld [vmem:[%s8 + $0x48] sm:$0xff]
        %v2053 = vld [vmem:[%s8 + $0x50] sm:$0xff]
        %v2054 = vld [vmem:[%s8 + $0x58] sm:$0xff]
        %v2055 = vld [vmem:[%s8 + $0x60] sm:$0xff]
        %v2056 = vld [vmem:[%s8 + $0x68] sm:$0xff]
        %v2057 = vld [vmem:[%s8 + $0x70] sm:$0xff]
        %v2058 = vld [vmem:[%s8 + $0x78] sm:$0xff]
        %v2059 = vld [vmem:[%s9] sm:$0xff]
        %v2060 = vld [vmem:[%s9 + $0x8] sm:$0xff]
        %v2061 = vld [vmem:[%s9 + $0x10] sm:$0xff]
        %v2062 = vld [vmem:[%s9 + $0x18] sm:$0xff]
        %v2063 = vld [vmem:[%s9 + $0x20] sm:$0xff]
        %v2064 = vld [vmem:[%s9 + $0x28] sm:$0xff]
        %v2065 = vld [vmem:[%s9 + $0x30] sm:$0xff]
        %v2066 = vld [vmem:[%s9 + $0x38] sm:$0xff]
        %v2067 = vld [vmem:[%s9 + $0x40] sm:$0xff]
        %v2068 = vld [vmem:[%s9 + $0x48] sm:$0xff]
        %v2069 = vld [vmem:[%s9 + $0x50] sm:$0xff]
        %v2070 = vld [vmem:[%s9 + $0x58] sm:$0xff]
        %v2071 = vld [vmem:[%s9 + $0x60] sm:$0xff]
        %v2072 = vld [vmem:[%s9 + $0x68] sm:$0xff]
        %v2073 = vld [vmem:[%s9 + $0x70] sm:$0xff]
        %v2074 = vld [vmem:[%s9 + $0x78] sm:$0xff]
        %2076 = vset.pattern.permute.xlu0 0
        %2077 = vperm.xlu0 %2076, %v2059
        %v2078 = vpop.permute.xlu0 %2077
        %2081 = vset.pattern.permute.xlu0 0
        %2082 = vperm.xlu0 %2081, %v2060
        %v2083 = vpop.permute.xlu0 %2082
        %2086 = vset.pattern.permute.xlu0 0
        %2087 = vperm.xlu0 %2086, %v2061
        %v2088 = vpop.permute.xlu0 %2087
        %2091 = vset.pattern.permute.xlu0 0
        %2092 = vperm.xlu0 %2091, %v2062
        %v2093 = vpop.permute.xlu0 %2092
        %2096 = vset.pattern.permute.xlu0 0
        %2097 = vperm.xlu0 %2096, %v2063
        %v2098 = vpop.permute.xlu0 %2097
        %2101 = vset.pattern.permute.xlu0 0
        %2102 = vperm.xlu0 %2101, %v2064
        %v2103 = vpop.permute.xlu0 %2102
        %2106 = vset.pattern.permute.xlu0 0
        %2107 = vperm.xlu0 %2106, %v2065
        %v2108 = vpop.permute.xlu0 %2107
        %2111 = vset.pattern.permute.xlu0 0
        %2112 = vperm.xlu0 %2111, %v2066
        %v2113 = vpop.permute.xlu0 %2112
        %2116 = vset.pattern.permute.xlu0 0
        %2117 = vperm.xlu0 %2116, %v2067
        %v2118 = vpop.permute.xlu0 %2117
        %2121 = vset.pattern.permute.xlu0 0
        %2122 = vperm.xlu0 %2121, %v2068
        %v2123 = vpop.permute.xlu0 %2122
        %2126 = vset.pattern.permute.xlu0 0
        %2127 = vperm.xlu0 %2126, %v2069
        %v2128 = vpop.permute.xlu0 %2127
        %2131 = vset.pattern.permute.xlu0 0
        %2132 = vperm.xlu0 %2131, %v2070
        %v2133 = vpop.permute.xlu0 %2132
        %2136 = vset.pattern.permute.xlu0 0
        %2137 = vperm.xlu0 %2136, %v2071
        %v2138 = vpop.permute.xlu0 %2137
        %2141 = vset.pattern.permute.xlu0 0
        %2142 = vperm.xlu0 %2141, %v2072
        %v2143 = vpop.permute.xlu0 %2142
        %2146 = vset.pattern.permute.xlu0 0
        %2147 = vperm.xlu0 %2146, %v2073
        %v2148 = vpop.permute.xlu0 %2147
        %2151 = vset.pattern.permute.xlu0 0
        %2152 = vperm.xlu0 %2151, %v2074
        %v2153 = vpop.permute.xlu0 %2152
        %v2171 = vunpack.c.l.b16 %v2043
        %v2172 = vunpack.c.h.b16 %v2043
        %v2173 = vunpack.c.l.b16 %v2044
        %v2174 = vunpack.c.h.b16 %v2044
        %v2175 = vunpack.c.l.b16 %v2045
        %v2176 = vunpack.c.h.b16 %v2045
        %v2177 = vunpack.c.l.b16 %v2046
        %v2178 = vunpack.c.h.b16 %v2046
        %v2179 = vunpack.c.l.b16 %v2047
        %v2180 = vunpack.c.h.b16 %v2047
        %v2181 = vunpack.c.l.b16 %v2048
        %v2182 = vunpack.c.h.b16 %v2048
        %v2183 = vunpack.c.l.b16 %v2049
        %v2184 = vunpack.c.h.b16 %v2049
        %v2185 = vunpack.c.l.b16 %v2050
        %v2186 = vunpack.c.h.b16 %v2050
        %v2187 = vunpack.c.l.b16 %v2051
        %v2188 = vunpack.c.h.b16 %v2051
        %v2189 = vunpack.c.l.b16 %v2052
        %v2190 = vunpack.c.h.b16 %v2052
        %v2191 = vunpack.c.l.b16 %v2053
        %v2192 = vunpack.c.h.b16 %v2053
        %v2193 = vunpack.c.l.b16 %v2054
        %v2194 = vunpack.c.h.b16 %v2054
        %v2195 = vunpack.c.l.b16 %v2055
        %v2196 = vunpack.c.h.b16 %v2055
        %v2197 = vunpack.c.l.b16 %v2056
        %v2198 = vunpack.c.h.b16 %v2056
        %v2199 = vunpack.c.l.b16 %v2057
        %v2200 = vunpack.c.h.b16 %v2057
        %v2201 = vunpack.c.l.b16 %v2058
        %v2202 = vunpack.c.h.b16 %v2058
        %v2203 = vpack.c.b16 %v2173, %v2171
        %v2204 = vpack.c.b16 %v2174, %v2172
        %v2205 = vpack.c.b16 %v2177, %v2175
        %v2206 = vpack.c.b16 %v2178, %v2176
        %v2207 = vpack.c.b16 %v2181, %v2179
        %v2208 = vpack.c.b16 %v2182, %v2180
        %v2209 = vpack.c.b16 %v2185, %v2183
        %v2210 = vpack.c.b16 %v2186, %v2184
        %v2211 = vpack.c.b16 %v2189, %v2187
        %v2212 = vpack.c.b16 %v2190, %v2188
        %v2213 = vpack.c.b16 %v2193, %v2191
        %v2214 = vpack.c.b16 %v2194, %v2192
        %v2215 = vpack.c.b16 %v2197, %v2195
        %v2216 = vpack.c.b16 %v2198, %v2196
        %v2217 = vpack.c.b16 %v2201, %v2199
        %v2218 = vpack.c.b16 %v2202, %v2200
        %v2228 = vsel %vm1335, %v2204, 0
        %v2231 = vsel %vm1335, %v2206, 0
        %v2234 = vsel %vm1335, %v2208, 0
        %v2237 = vsel %vm1335, %v2210, 0
        %v2240 = vsel %vm1335, %v2212, 0
        %v2243 = vsel %vm1335, %v2214, 0
        %v2246 = vsel %vm1335, %v2216, 0
        %v2249 = vsel %vm1335, %v2218, 0
        %2251 = vmatprep.subr.bf16.mxu0 0
        %2252 = vmatpush1.bf16.msra.mxu0 %v2042
        %2253 = vmatprep.subr.bf16.mxu0 0
        %2254 = vmatpush1.bf16.msra.mxu0 %v2041
        %2255 = vmatprep.subr.bf16.mxu0 0
        %2256 = vmatpush1.bf16.msra.mxu0 %v2040
        %2257 = vmatprep.subr.bf16.mxu0 0
        %2258 = vmatpush1.bf16.msra.mxu0 %v2039
        %2259 = vmatprep.subr.bf16.mxu0 0
        %2260 = vmatpush1.bf16.msra.mxu0 %v2038
        %2261 = vmatprep.subr.bf16.mxu0 0
        %2262 = vmatpush1.bf16.msra.mxu0 %v2037
        %2263 = vmatprep.subr.bf16.mxu0 0
        %2264 = vmatpush1.bf16.msra.mxu0 %v2036
        %2265 = vmatprep.subr.bf16.mxu0 0
        %2266 = vmatpush1.bf16.msra.mxu0 %v2035
        %2267 = vmatprep.subr.bf16.mxu0 0
        %2268 = vmatpush2.bf16.msra.mxu0 0
        %2269 = vmatprep.subr.bf16.mxu0 0
        %2270 = vmatpush2.bf16.msra.mxu0 0
        %2271 = vmatprep.subr.bf16.mxu0 0
        %2272 = vmatpush2.bf16.msra.mxu0 0
        %2273 = vmatprep.subr.bf16.mxu0 0
        %2274 = vmatpush2.bf16.msra.mxu0 0
        %2275 = vmatprep.subr.bf16.mxu0 0
        %2276 = vmatpush2.bf16.msra.mxu0 %v1182
        %2277 = vmatprep.subr.bf16.mxu0 0
        %2278 = vmatpush2.bf16.msra.mxu0 %v1181
        %2279 = vmatprep.subr.bf16.mxu0 0
        %2280 = vmatpush2.bf16.msra.mxu0 %v1180
        %2281 = vmatprep.subr.bf16.mxu0 0
        %2282 = vmatpush2.bf16.msra.mxu0 %v1179
        %2283 = vmatprep.mubr.bf16.mxu0 %v2228
        %2284 = vmatmul.mubr.bf16.gmra.mxu0 %v2203
        %v2285 = vpop.f32.mrf.mxu0
        %v2286 = vadd.f32 %v2078, %v2285
        %v2287 = vpop.f32.mrf.mxu0
        %v2288 = vpop.f32.mrf.mxu0
        %v2289 = vadd.f32 %v2083, %v2288
        %v2290 = vpop.f32.mrf.mxu0
        %2291 = vmatprep.mubr.bf16.mxu0 %v2231
        %2292 = vmatmul.mubr.bf16.gmra.mxu0 %v2205
        %v2293 = vpop.f32.mrf.mxu0
        %v2294 = vadd.f32 %v2088, %v2293
        %v2295 = vpop.f32.mrf.mxu0
        %v2296 = vpop.f32.mrf.mxu0
        %v2297 = vadd.f32 %v2093, %v2296
        %v2298 = vpop.f32.mrf.mxu0
        %2299 = vmatprep.mubr.bf16.mxu0 %v2234
        %2300 = vmatmul.mubr.bf16.gmra.mxu0 %v2207
        %v2301 = vpop.f32.mrf.mxu0
        %v2302 = vadd.f32 %v2098, %v2301
        %v2303 = vpop.f32.mrf.mxu0
        %v2304 = vpop.f32.mrf.mxu0
        %v2305 = vadd.f32 %v2103, %v2304
        %v2306 = vpop.f32.mrf.mxu0
        %2307 = vmatprep.mubr.bf16.mxu0 %v2237
        %2308 = vmatmul.mubr.bf16.gmra.mxu0 %v2209
        %v2309 = vpop.f32.mrf.mxu0
        %v2310 = vadd.f32 %v2108, %v2309
        %v2311 = vpop.f32.mrf.mxu0
        %v2312 = vpop.f32.mrf.mxu0
        %v2313 = vadd.f32 %v2113, %v2312
        %v2314 = vpop.f32.mrf.mxu0
        %2315 = vmatprep.mubr.bf16.mxu0 %v2240
        %2316 = vmatmul.mubr.bf16.gmra.mxu0 %v2211
        %v2317 = vpop.f32.mrf.mxu0
        %v2318 = vadd.f32 %v2118, %v2317
        %v2319 = vpop.f32.mrf.mxu0
        %v2320 = vpop.f32.mrf.mxu0
        %v2321 = vadd.f32 %v2123, %v2320
        %v2322 = vpop.f32.mrf.mxu0
        %2323 = vmatprep.mubr.bf16.mxu0 %v2243
        %2324 = vmatmul.mubr.bf16.gmra.mxu0 %v2213
        %v2325 = vpop.f32.mrf.mxu0
        %v2326 = vadd.f32 %v2128, %v2325
        %v2327 = vpop.f32.mrf.mxu0
        %v2328 = vpop.f32.mrf.mxu0
        %v2329 = vadd.f32 %v2133, %v2328
        %v2330 = vpop.f32.mrf.mxu0
        %2331 = vmatprep.mubr.bf16.mxu0 %v2246
        %2332 = vmatmul.mubr.bf16.gmra.mxu0 %v2215
        %v2333 = vpop.f32.mrf.mxu0
        %v2334 = vadd.f32 %v2138, %v2333
        %v2335 = vpop.f32.mrf.mxu0
        %v2336 = vpop.f32.mrf.mxu0
        %v2337 = vadd.f32 %v2143, %v2336
        %v2338 = vpop.f32.mrf.mxu0
        %2339 = vmatprep.mubr.bf16.mxu0 %v2249
        %2340 = vmatmul.mubr.bf16.gmra.mxu0 %v2217
        %v2341 = vpop.f32.mrf.mxu0
        %v2342 = vadd.f32 %v2148, %v2341
        %v2343 = vpop.f32.mrf.mxu0
        %v2344 = vpop.f32.mrf.mxu0
        %v2345 = vadd.f32 %v2153, %v2344
        %v2346 = vpop.f32.mrf.mxu0
        %2347 = vdwg.mxu0
        %v2348 = vmax.f32 %v2286, 0.0
        %v2349 = vmax.f32 %v2289, 0.0
        %v2350 = vmax.f32 %v2294, 0.0
        %v2351 = vmax.f32 %v2297, 0.0
        %v2352 = vmax.f32 %v2302, 0.0
        %v2353 = vmax.f32 %v2305, 0.0
        %v2354 = vmax.f32 %v2310, 0.0
        %v2355 = vmax.f32 %v2313, 0.0
        %v2356 = vmax.f32 %v2318, 0.0
        %v2357 = vmax.f32 %v2321, 0.0
        %v2358 = vmax.f32 %v2326, 0.0
        %v2359 = vmax.f32 %v2329, 0.0
        %v2360 = vmax.f32 %v2334, 0.0
        %v2361 = vmax.f32 %v2337, 0.0
        %v2362 = vmax.f32 %v2342, 0.0
        %v2363 = vmax.f32 %v2345, 0.0
        %v2364 = vpack.c.bf16 %v2349, %v2348
        %v2365 = vpack.c.bf16 %v2351, %v2350
        %v2366 = vpack.c.bf16 %v2353, %v2352
        %v2367 = vpack.c.bf16 %v2355, %v2354
        %v2368 = vpack.c.bf16 %v2357, %v2356
        %v2369 = vpack.c.bf16 %v2359, %v2358
        %v2370 = vpack.c.bf16 %v2361, %v2360
        %v2371 = vpack.c.bf16 %v2363, %v2362
        %v2372 = vld [vmem:[%s10] sm:$0xf]
        %v2373 = vld [vmem:[%s10 + $0x4] sm:$0xf]
        %v2374 = vld [vmem:[%s10 + $0x8] sm:$0xf]
        %v2375 = vld [vmem:[%s10 + $0xc] sm:$0xf]
        %v2376 = vld [vmem:[%s10 + $0x10] sm:$0xf]
        %v2377 = vld [vmem:[%s10 + $0x14] sm:$0xf]
        %v2378 = vld [vmem:[%s10 + $0x18] sm:$0xf]
        %v2379 = vld [vmem:[%s10 + $0x1c] sm:$0xf]
        %v2380 = vld [vmem:[%s10 + $0x20] sm:$0xf]
        %v2381 = vld [vmem:[%s10 + $0x24] sm:$0xf]
        %v2382 = vld [vmem:[%s10 + $0x28] sm:$0xf]
        %v2383 = vld [vmem:[%s10 + $0x2c] sm:$0xf]
        %v2384 = vld [vmem:[%s10 + $0x30] sm:$0xf]
        %v2385 = vld [vmem:[%s10 + $0x34] sm:$0xf]
        %v2386 = vld [vmem:[%s10 + $0x38] sm:$0xf]
        %v2387 = vld [vmem:[%s10 + $0x3c] sm:$0xf]
        %v2388 = vld [vmem:[%s11] sm:$0xff]
        %v2389 = vld [vmem:[%s11 + $0x8] sm:$0xff]
        %v2390 = vld [vmem:[%s11 + $0x10] sm:$0xff]
        %v2391 = vld [vmem:[%s11 + $0x18] sm:$0xff]
        %v2392 = vld [vmem:[%s11 + $0x20] sm:$0xff]
        %v2393 = vld [vmem:[%s11 + $0x28] sm:$0xff]
        %v2394 = vld [vmem:[%s11 + $0x30] sm:$0xff]
        %v2395 = vld [vmem:[%s11 + $0x38] sm:$0xff]
        %v2396 = vld [vmem:[%s11 + $0x40] sm:$0xff]
        %v2397 = vld [vmem:[%s11 + $0x48] sm:$0xff]
        %v2398 = vld [vmem:[%s11 + $0x50] sm:$0xff]
        %v2399 = vld [vmem:[%s11 + $0x58] sm:$0xff]
        %v2400 = vld [vmem:[%s11 + $0x60] sm:$0xff]
        %v2401 = vld [vmem:[%s11 + $0x68] sm:$0xff]
        %v2402 = vld [vmem:[%s11 + $0x70] sm:$0xff]
        %v2403 = vld [vmem:[%s11 + $0x78] sm:$0xff]
        %2405 = vset.pattern.permute.xlu0 0
        %2406 = vperm.xlu0 %2405, %v2388
        %v2407 = vpop.permute.xlu0 %2406
        %2410 = vset.pattern.permute.xlu0 0
        %2411 = vperm.xlu0 %2410, %v2389
        %v2412 = vpop.permute.xlu0 %2411
        %2415 = vset.pattern.permute.xlu0 0
        %2416 = vperm.xlu0 %2415, %v2390
        %v2417 = vpop.permute.xlu0 %2416
        %2420 = vset.pattern.permute.xlu0 0
        %2421 = vperm.xlu0 %2420, %v2391
        %v2422 = vpop.permute.xlu0 %2421
        %2425 = vset.pattern.permute.xlu0 0
        %2426 = vperm.xlu0 %2425, %v2392
        %v2427 = vpop.permute.xlu0 %2426
        %2430 = vset.pattern.permute.xlu0 0
        %2431 = vperm.xlu0 %2430, %v2393
        %v2432 = vpop.permute.xlu0 %2431
        %2435 = vset.pattern.permute.xlu0 0
        %2436 = vperm.xlu0 %2435, %v2394
        %v2437 = vpop.permute.xlu0 %2436
        %2440 = vset.pattern.permute.xlu0 0
        %2441 = vperm.xlu0 %2440, %v2395
        %v2442 = vpop.permute.xlu0 %2441
        %2445 = vset.pattern.permute.xlu0 0
        %2446 = vperm.xlu0 %2445, %v2396
        %v2447 = vpop.permute.xlu0 %2446
        %2450 = vset.pattern.permute.xlu0 0
        %2451 = vperm.xlu0 %2450, %v2397
        %v2452 = vpop.permute.xlu0 %2451
        %2455 = vset.pattern.permute.xlu0 0
        %2456 = vperm.xlu0 %2455, %v2398
        %v2457 = vpop.permute.xlu0 %2456
        %2460 = vset.pattern.permute.xlu0 0
        %2461 = vperm.xlu0 %2460, %v2399
        %v2462 = vpop.permute.xlu0 %2461
        %2465 = vset.pattern.permute.xlu0 0
        %2466 = vperm.xlu0 %2465, %v2400
        %v2467 = vpop.permute.xlu0 %2466
        %2470 = vset.pattern.permute.xlu0 0
        %2471 = vperm.xlu0 %2470, %v2401
        %v2472 = vpop.permute.xlu0 %2471
        %2475 = vset.pattern.permute.xlu0 0
        %2476 = vperm.xlu0 %2475, %v2402
        %v2477 = vpop.permute.xlu0 %2476
        %2480 = vset.pattern.permute.xlu0 0
        %2481 = vperm.xlu0 %2480, %v2403
        %v2482 = vpop.permute.xlu0 %2481
        %v2500 = vunpack.c.l.b16 %v2372
        %v2501 = vunpack.c.l.b16 %v2373
        %v2502 = vunpack.c.l.b16 %v2374
        %v2503 = vunpack.c.l.b16 %v2375
        %v2504 = vunpack.c.l.b16 %v2376
        %v2505 = vunpack.c.l.b16 %v2377
        %v2506 = vunpack.c.l.b16 %v2378
        %v2507 = vunpack.c.l.b16 %v2379
        %v2508 = vunpack.c.l.b16 %v2380
        %v2509 = vunpack.c.l.b16 %v2381
        %v2510 = vunpack.c.l.b16 %v2382
        %v2511 = vunpack.c.l.b16 %v2383
        %v2512 = vunpack.c.l.b16 %v2384
        %v2513 = vunpack.c.l.b16 %v2385
        %v2514 = vunpack.c.l.b16 %v2386
        %v2515 = vunpack.c.l.b16 %v2387
        %v2516 = vpack.c.b16 %v2501, %v2500
        %v2517 = vpack.c.b16 %v2503, %v2502
        %v2518 = vpack.c.b16 %v2505, %v2504
        %v2519 = vpack.c.b16 %v2507, %v2506
        %v2520 = vpack.c.b16 %v2509, %v2508
        %v2521 = vpack.c.b16 %v2511, %v2510
        %v2522 = vpack.c.b16 %v2513, %v2512
        %v2523 = vpack.c.b16 %v2515, %v2514
        %2532 = vmatprep.subr.bf16.mxu0 0
        %2533 = vmatpush1.bf16.msra.mxu0 %v2371
        %2534 = vmatprep.subr.bf16.mxu0 0
        %2535 = vmatpush1.bf16.msra.mxu0 %v2370
        %2536 = vmatprep.subr.bf16.mxu0 0
        %2537 = vmatpush1.bf16.msra.mxu0 %v2369
        %2538 = vmatprep.subr.bf16.mxu0 0
        %2539 = vmatpush1.bf16.msra.mxu0 %v2368
        %2540 = vmatprep.subr.bf16.mxu0 0
        %2541 = vmatpush1.bf16.msra.mxu0 %v2367
        %2542 = vmatprep.subr.bf16.mxu0 0
        %2543 = vmatpush1.bf16.msra.mxu0 %v2366
        %2544 = vmatprep.subr.bf16.mxu0 0
        %2545 = vmatpush1.bf16.msra.mxu0 %v2365
        %2546 = vmatprep.subr.bf16.mxu0 0
        %2547 = vmatpush1.bf16.msra.mxu0 %v2364
        %2548 = vmatprep.subr.bf16.mxu0 0
        %2549 = vmatpush2.bf16.msra.mxu0 0
        %2550 = vmatprep.subr.bf16.mxu0 0
        %2551 = vmatpush2.bf16.msra.mxu0 0
        %2552 = vmatprep.subr.bf16.mxu0 0
        %2553 = vmatpush2.bf16.msra.mxu0 0
        %2554 = vmatprep.subr.bf16.mxu0 0
        %2555 = vmatpush2.bf16.msra.mxu0 0
        %2556 = vmatprep.subr.bf16.mxu0 0
        %2557 = vmatpush2.bf16.msra.mxu0 0
        %2558 = vmatprep.subr.bf16.mxu0 0
        %2559 = vmatpush2.bf16.msra.mxu0 0
        %2560 = vmatprep.subr.bf16.mxu0 0
        %2561 = vmatpush2.bf16.msra.mxu0 0
        %2562 = vmatprep.subr.bf16.mxu0 0
        %2563 = vmatpush2.bf16.msra.mxu0 0
        %2564 = vmatprep.mubr.bf16.mxu0 0
        %2565 = vmatmul.mubr.bf16.gmra.mxu0 %v2516
        %v2566 = vpop.f32.mrf.mxu0
        %v2567 = vadd.f32 %v2407, %v2566
        %v2568 = vpop.f32.mrf.mxu0
        %v2569 = vpop.f32.mrf.mxu0
        %v2570 = vadd.f32 %v2412, %v2569
        %v2571 = vpop.f32.mrf.mxu0
        %2572 = vmatprep.mubr.bf16.mxu0 0
        %2573 = vmatmul.mubr.bf16.gmra.mxu0 %v2517
        %v2574 = vpop.f32.mrf.mxu0
        %v2575 = vadd.f32 %v2417, %v2574
        %v2576 = vpop.f32.mrf.mxu0
        %v2577 = vpop.f32.mrf.mxu0
        %v2578 = vadd.f32 %v2422, %v2577
        %v2579 = vpop.f32.mrf.mxu0
        %2580 = vmatprep.mubr.bf16.mxu0 0
        %2581 = vmatmul.mubr.bf16.gmra.mxu0 %v2518
        %v2582 = vpop.f32.mrf.mxu0
        %v2583 = vadd.f32 %v2427, %v2582
        %v2584 = vpop.f32.mrf.mxu0
        %v2585 = vpop.f32.mrf.mxu0
        %v2586 = vadd.f32 %v2432, %v2585
        %v2587 = vpop.f32.mrf.mxu0
        %2588 = vmatprep.mubr.bf16.mxu0 0
        %2589 = vmatmul.mubr.bf16.gmra.mxu0 %v2519
        %v2590 = vpop.f32.mrf.mxu0
        %v2591 = vadd.f32 %v2437, %v2590
        %v2592 = vpop.f32.mrf.mxu0
        %v2593 = vpop.f32.mrf.mxu0
        %v2594 = vadd.f32 %v2442, %v2593
        %v2595 = vpop.f32.mrf.mxu0
        %2596 = vmatprep.mubr.bf16.mxu0 0
        %2597 = vmatmul.mubr.bf16.gmra.mxu0 %v2520
        %v2598 = vpop.f32.mrf.mxu0
        %v2599 = vadd.f32 %v2447, %v2598
        %v2600 = vpop.f32.mrf.mxu0
        %v2601 = vpop.f32.mrf.mxu0
        %v2602 = vadd.f32 %v2452, %v2601
        %v2603 = vpop.f32.mrf.mxu0
        %2604 = vmatprep.mubr.bf16.mxu0 0
        %2605 = vmatmul.mubr.bf16.gmra.mxu0 %v2521
        %v2606 = vpop.f32.mrf.mxu0
        %v2607 = vadd.f32 %v2457, %v2606
        %v2608 = vpop.f32.mrf.mxu0
        %v2609 = vpop.f32.mrf.mxu0
        %v2610 = vadd.f32 %v2462, %v2609
        %v2611 = vpop.f32.mrf.mxu0
        %2612 = vmatprep.mubr.bf16.mxu0 0
        %2613 = vmatmul.mubr.bf16.gmra.mxu0 %v2522
        %v2614 = vpop.f32.mrf.mxu0
        %v2615 = vadd.f32 %v2467, %v2614
        %v2616 = vpop.f32.mrf.mxu0
        %v2617 = vpop.f32.mrf.mxu0
        %v2618 = vadd.f32 %v2472, %v2617
        %v2619 = vpop.f32.mrf.mxu0
        %2620 = vmatprep.mubr.bf16.mxu0 0
        %2621 = vmatmul.mubr.bf16.gmra.mxu0 %v2523
        %v2622 = vpop.f32.mrf.mxu0
        %v2623 = vadd.f32 %v2477, %v2622
        %v2624 = vpop.f32.mrf.mxu0
        %v2625 = vpop.f32.mrf.mxu0
        %v2626 = vadd.f32 %v2482, %v2625
        %v2627 = vpop.f32.mrf.mxu0
        %2628 = vdwg.mxu0
        %v2629 = vmax.f32 %v2567, 0.0
        %v2630 = vmax.f32 %v2570, 0.0
        %v2631 = vmax.f32 %v2575, 0.0
        %v2632 = vmax.f32 %v2578, 0.0
        %v2633 = vmax.f32 %v2583, 0.0
        %v2634 = vmax.f32 %v2586, 0.0
        %v2635 = vmax.f32 %v2591, 0.0
        %v2636 = vmax.f32 %v2594, 0.0
        %v2637 = vmax.f32 %v2599, 0.0
        %v2638 = vmax.f32 %v2602, 0.0
        %v2639 = vmax.f32 %v2607, 0.0
        %v2640 = vmax.f32 %v2610, 0.0
        %v2641 = vmax.f32 %v2615, 0.0
        %v2642 = vmax.f32 %v2618, 0.0
        %v2643 = vmax.f32 %v2623, 0.0
        %v2644 = vmax.f32 %v2626, 0.0
        %v2645 = vpack.c.bf16 %v2630, %v2629
        %v2646 = vpack.c.bf16 %v2632, %v2631
        %v2647 = vpack.c.bf16 %v2634, %v2633
        %v2648 = vpack.c.bf16 %v2636, %v2635
        %v2649 = vpack.c.bf16 %v2638, %v2637
        %v2650 = vpack.c.bf16 %v2640, %v2639
        %v2651 = vpack.c.bf16 %v2642, %v2641
        %v2652 = vpack.c.bf16 %v2644, %v2643
        %v2653 = vld [vmem:[%s12] sm:$0xf]
        %v2654 = vld [vmem:[%s12 + $0x4] sm:$0xf]
        %v2655 = vld [vmem:[%s12 + $0x8] sm:$0xf]
        %v2656 = vld [vmem:[%s12 + $0xc] sm:$0xf]
        %v2657 = vld [vmem:[%s12 + $0x10] sm:$0xf]
        %v2658 = vld [vmem:[%s12 + $0x14] sm:$0xf]
        %v2659 = vld [vmem:[%s12 + $0x18] sm:$0xf]
        %v2660 = vld [vmem:[%s12 + $0x1c] sm:$0xf]
        %v2661 = vld [vmem:[%s12 + $0x20] sm:$0xf]
        %v2662 = vld [vmem:[%s12 + $0x24] sm:$0xf]
        %v2663 = vld [vmem:[%s12 + $0x28] sm:$0xf]
        %v2664 = vld [vmem:[%s12 + $0x2c] sm:$0xf]
        %v2665 = vld [vmem:[%s12 + $0x30] sm:$0xf]
        %v2666 = vld [vmem:[%s12 + $0x34] sm:$0xf]
        %v2667 = vld [vmem:[%s12 + $0x38] sm:$0xf]
        %v2668 = vld [vmem:[%s12 + $0x3c] sm:$0xf]
        %v2669 = vld [vmem:[%s13] sm:$0xff]
        %v2670 = vld [vmem:[%s13 + $0x8] sm:$0xff]
        %v2671 = vld [vmem:[%s13 + $0x10] sm:$0xff]
        %v2672 = vld [vmem:[%s13 + $0x18] sm:$0xff]
        %v2673 = vld [vmem:[%s13 + $0x20] sm:$0xff]
        %v2674 = vld [vmem:[%s13 + $0x28] sm:$0xff]
        %v2675 = vld [vmem:[%s13 + $0x30] sm:$0xff]
        %v2676 = vld [vmem:[%s13 + $0x38] sm:$0xff]
        %v2677 = vld [vmem:[%s13 + $0x40] sm:$0xff]
        %v2678 = vld [vmem:[%s13 + $0x48] sm:$0xff]
        %v2679 = vld [vmem:[%s13 + $0x50] sm:$0xff]
        %v2680 = vld [vmem:[%s13 + $0x58] sm:$0xff]
        %v2681 = vld [vmem:[%s13 + $0x60] sm:$0xff]
        %v2682 = vld [vmem:[%s13 + $0x68] sm:$0xff]
        %v2683 = vld [vmem:[%s13 + $0x70] sm:$0xff]
        %v2684 = vld [vmem:[%s13 + $0x78] sm:$0xff]
        %2686 = vset.pattern.permute.xlu0 0
        %2687 = vperm.xlu0 %2686, %v2669
        %v2688 = vpop.permute.xlu0 %2687
        %2691 = vset.pattern.permute.xlu0 0
        %2692 = vperm.xlu0 %2691, %v2670
        %v2693 = vpop.permute.xlu0 %2692
        %2696 = vset.pattern.permute.xlu0 0
        %2697 = vperm.xlu0 %2696, %v2671
        %v2698 = vpop.permute.xlu0 %2697
        %2701 = vset.pattern.permute.xlu0 0
        %2702 = vperm.xlu0 %2701, %v2672
        %v2703 = vpop.permute.xlu0 %2702
        %2706 = vset.pattern.permute.xlu0 0
        %2707 = vperm.xlu0 %2706, %v2673
        %v2708 = vpop.permute.xlu0 %2707
        %2711 = vset.pattern.permute.xlu0 0
        %2712 = vperm.xlu0 %2711, %v2674
        %v2713 = vpop.permute.xlu0 %2712
        %2716 = vset.pattern.permute.xlu0 0
        %2717 = vperm.xlu0 %2716, %v2675
        %v2718 = vpop.permute.xlu0 %2717
        %2721 = vset.pattern.permute.xlu0 0
        %2722 = vperm.xlu0 %2721, %v2676
        %v2723 = vpop.permute.xlu0 %2722
        %2726 = vset.pattern.permute.xlu0 0
        %2727 = vperm.xlu0 %2726, %v2677
        %v2728 = vpop.permute.xlu0 %2727
        %2731 = vset.pattern.permute.xlu0 0
        %2732 = vperm.xlu0 %2731, %v2678
        %v2733 = vpop.permute.xlu0 %2732
        %2736 = vset.pattern.permute.xlu0 0
        %2737 = vperm.xlu0 %2736, %v2679
        %v2738 = vpop.permute.xlu0 %2737
        %2741 = vset.pattern.permute.xlu0 0
        %2742 = vperm.xlu0 %2741, %v2680
        %v2743 = vpop.permute.xlu0 %2742
        %2746 = vset.pattern.permute.xlu0 0
        %2747 = vperm.xlu0 %2746, %v2681
        %v2748 = vpop.permute.xlu0 %2747
        %2751 = vset.pattern.permute.xlu0 0
        %2752 = vperm.xlu0 %2751, %v2682
        %v2753 = vpop.permute.xlu0 %2752
        %2756 = vset.pattern.permute.xlu0 0
        %2757 = vperm.xlu0 %2756, %v2683
        %v2758 = vpop.permute.xlu0 %2757
        %2761 = vset.pattern.permute.xlu0 0
        %2762 = vperm.xlu0 %2761, %v2684
        %v2763 = vpop.permute.xlu0 %2762
        %v2781 = vunpack.c.l.b16 %v2653
        %v2782 = vunpack.c.l.b16 %v2654
        %v2783 = vunpack.c.l.b16 %v2655
        %v2784 = vunpack.c.l.b16 %v2656
        %v2785 = vunpack.c.l.b16 %v2657
        %v2786 = vunpack.c.l.b16 %v2658
        %v2787 = vunpack.c.l.b16 %v2659
        %v2788 = vunpack.c.l.b16 %v2660
        %v2789 = vunpack.c.l.b16 %v2661
        %v2790 = vunpack.c.l.b16 %v2662
        %v2791 = vunpack.c.l.b16 %v2663
        %v2792 = vunpack.c.l.b16 %v2664
        %v2793 = vunpack.c.l.b16 %v2665
        %v2794 = vunpack.c.l.b16 %v2666
        %v2795 = vunpack.c.l.b16 %v2667
        %v2796 = vunpack.c.l.b16 %v2668
        %v2797 = vpack.c.b16 %v2782, %v2781
        %v2798 = vpack.c.b16 %v2784, %v2783
        %v2799 = vpack.c.b16 %v2786, %v2785
        %v2800 = vpack.c.b16 %v2788, %v2787
        %v2801 = vpack.c.b16 %v2790, %v2789
        %v2802 = vpack.c.b16 %v2792, %v2791
        %v2803 = vpack.c.b16 %v2794, %v2793
        %v2804 = vpack.c.b16 %v2796, %v2795
        %2813 = vmatprep.subr.bf16.mxu0 0
        %2814 = vmatpush1.bf16.msra.mxu0 %v2652
        %2815 = vmatprep.subr.bf16.mxu0 0
        %2816 = vmatpush1.bf16.msra.mxu0 %v2651
        %2817 = vmatprep.subr.bf16.mxu0 0
        %2818 = vmatpush1.bf16.msra.mxu0 %v2650
        %2819 = vmatprep.subr.bf16.mxu0 0
        %2820 = vmatpush1.bf16.msra.mxu0 %v2649
        %2821 = vmatprep.subr.bf16.mxu0 0
        %2822 = vmatpush1.bf16.msra.mxu0 %v2648
        %2823 = vmatprep.subr.bf16.mxu0 0
        %2824 = vmatpush1.bf16.msra.mxu0 %v2647
        %2825 = vmatprep.subr.bf16.mxu0 0
        %2826 = vmatpush1.bf16.msra.mxu0 %v2646
        %2827 = vmatprep.subr.bf16.mxu0 0
        %2828 = vmatpush1.bf16.msra.mxu0 %v2645
        %2829 = vmatprep.subr.bf16.mxu0 0
        %2830 = vmatpush2.bf16.msra.mxu0 0
        %2831 = vmatprep.subr.bf16.mxu0 0
        %2832 = vmatpush2.bf16.msra.mxu0 0
        %2833 = vmatprep.subr.bf16.mxu0 0
        %2834 = vmatpush2.bf16.msra.mxu0 0
        %2835 = vmatprep.subr.bf16.mxu0 0
        %2836 = vmatpush2.bf16.msra.mxu0 0
        %2837 = vmatprep.subr.bf16.mxu0 0
        %2838 = vmatpush2.bf16.msra.mxu0 0
        %2839 = vmatprep.subr.bf16.mxu0 0
        %2840 = vmatpush2.bf16.msra.mxu0 0
        %2841 = vmatprep.subr.bf16.mxu0 0
        %2842 = vmatpush2.bf16.msra.mxu0 0
        %2843 = vmatprep.subr.bf16.mxu0 0
        %2844 = vmatpush2.bf16.msra.mxu0 0
        %2845 = vmatprep.mubr.bf16.mxu0 0
        %2846 = vmatmul.mubr.bf16.gmra.mxu0 %v2797
        %v2847 = vpop.f32.mrf.mxu0
        %v2848 = vadd.f32 %v2688, %v2847
        %v2849 = vpop.f32.mrf.mxu0
        %v2850 = vpop.f32.mrf.mxu0
        %v2851 = vadd.f32 %v2693, %v2850
        %v2852 = vpop.f32.mrf.mxu0
        %2853 = vmatprep.mubr.bf16.mxu0 0
        %2854 = vmatmul.mubr.bf16.gmra.mxu0 %v2798
        %v2855 = vpop.f32.mrf.mxu0
        %v2856 = vadd.f32 %v2698, %v2855
        %v2857 = vpop.f32.mrf.mxu0
        %v2858 = vpop.f32.mrf.mxu0
        %v2859 = vadd.f32 %v2703, %v2858
        %v2860 = vpop.f32.mrf.mxu0
        %2861 = vmatprep.mubr.bf16.mxu0 0
        %2862 = vmatmul.mubr.bf16.gmra.mxu0 %v2799
        %v2863 = vpop.f32.mrf.mxu0
        %v2864 = vadd.f32 %v2708, %v2863
        %v2865 = vpop.f32.mrf.mxu0
        %v2866 = vpop.f32.mrf.mxu0
        %v2867 = vadd.f32 %v2713, %v2866
        %v2868 = vpop.f32.mrf.mxu0
        %2869 = vmatprep.mubr.bf16.mxu0 0
        %2870 = vmatmul.mubr.bf16.gmra.mxu0 %v2800
        %v2871 = vpop.f32.mrf.mxu0
        %v2872 = vadd.f32 %v2718, %v2871
        %v2873 = vpop.f32.mrf.mxu0
        %v2874 = vpop.f32.mrf.mxu0
        %v2875 = vadd.f32 %v2723, %v2874
        %v2876 = vpop.f32.mrf.mxu0
        %2877 = vmatprep.mubr.bf16.mxu0 0
        %2878 = vmatmul.mubr.bf16.gmra.mxu0 %v2801
        %v2879 = vpop.f32.mrf.mxu0
        %v2880 = vadd.f32 %v2728, %v2879
        %v2881 = vpop.f32.mrf.mxu0
        %v2882 = vpop.f32.mrf.mxu0
        %v2883 = vadd.f32 %v2733, %v2882
        %v2884 = vpop.f32.mrf.mxu0
        %2885 = vmatprep.mubr.bf16.mxu0 0
        %2886 = vmatmul.mubr.bf16.gmra.mxu0 %v2802
        %v2887 = vpop.f32.mrf.mxu0
        %v2888 = vadd.f32 %v2738, %v2887
        %v2889 = vpop.f32.mrf.mxu0
        %v2890 = vpop.f32.mrf.mxu0
        %v2891 = vadd.f32 %v2743, %v2890
        %v2892 = vpop.f32.mrf.mxu0
        %2893 = vmatprep.mubr.bf16.mxu0 0
        %2894 = vmatmul.mubr.bf16.gmra.mxu0 %v2803
        %v2895 = vpop.f32.mrf.mxu0
        %v2896 = vadd.f32 %v2748, %v2895
        %v2897 = vpop.f32.mrf.mxu0
        %v2898 = vpop.f32.mrf.mxu0
        %v2899 = vadd.f32 %v2753, %v2898
        %v2900 = vpop.f32.mrf.mxu0
        %2901 = vmatprep.mubr.bf16.mxu0 0
        %2902 = vmatmul.mubr.bf16.gmra.mxu0 %v2804
        %v2903 = vpop.f32.mrf.mxu0
        %v2904 = vadd.f32 %v2758, %v2903
        %v2905 = vpop.f32.mrf.mxu0
        %v2906 = vpop.f32.mrf.mxu0
        %v2907 = vadd.f32 %v2763, %v2906
        %v2908 = vpop.f32.mrf.mxu0
        %2909 = vdwg.mxu0
        %v2910 = vmax.f32 %v2848, 0.0
        %v2911 = vmax.f32 %v2851, 0.0
        %v2912 = vmax.f32 %v2856, 0.0
        %v2913 = vmax.f32 %v2859, 0.0
        %v2914 = vmax.f32 %v2864, 0.0
        %v2915 = vmax.f32 %v2867, 0.0
        %v2916 = vmax.f32 %v2872, 0.0
        %v2917 = vmax.f32 %v2875, 0.0
        %v2918 = vmax.f32 %v2880, 0.0
        %v2919 = vmax.f32 %v2883, 0.0
        %v2920 = vmax.f32 %v2888, 0.0
        %v2921 = vmax.f32 %v2891, 0.0
        %v2922 = vmax.f32 %v2896, 0.0
        %v2923 = vmax.f32 %v2899, 0.0
        %v2924 = vmax.f32 %v2904, 0.0
        %v2925 = vmax.f32 %v2907, 0.0
        %v2926 = vpack.c.bf16 %v2911, %v2910
        %v2927 = vpack.c.bf16 %v2913, %v2912
        %v2928 = vpack.c.bf16 %v2915, %v2914
        %v2929 = vpack.c.bf16 %v2917, %v2916
        %v2930 = vpack.c.bf16 %v2919, %v2918
        %v2931 = vpack.c.bf16 %v2921, %v2920
        %v2932 = vpack.c.bf16 %v2923, %v2922
        %v2933 = vpack.c.bf16 %v2925, %v2924
        %v2934 = vld [vmem:[%s14] sm:$0xf]
        %v2935 = vld [vmem:[%s15] sm:$0xff]
        %2937 = vset.pattern.permute.xlu0 0
        %2938 = vperm.xlu0 %2937, %v2935
        %v2939 = vpop.permute.xlu0 %2938
        %2941 = vmatprep.subr.bf16.mxu0 0
        %2942 = vmatpush1.bf16.msra.mxu0 %v2933
        %2943 = vmatprep.subr.bf16.mxu0 0
        %2944 = vmatpush1.bf16.msra.mxu0 %v2932
        %2945 = vmatprep.subr.bf16.mxu0 0
        %2946 = vmatpush1.bf16.msra.mxu0 %v2931
        %2947 = vmatprep.subr.bf16.mxu0 0
        %2948 = vmatpush1.bf16.msra.mxu0 %v2930
        %2949 = vmatprep.subr.bf16.mxu0 0
        %2950 = vmatpush1.bf16.msra.mxu0 %v2929
        %2951 = vmatprep.subr.bf16.mxu0 0
        %2952 = vmatpush1.bf16.msra.mxu0 %v2928
        %2953 = vmatprep.subr.bf16.mxu0 0
        %2954 = vmatpush1.bf16.msra.mxu0 %v2927
        %2955 = vmatprep.subr.bf16.mxu0 0
        %2956 = vmatpush1.bf16.msra.mxu0 %v2926
        %2957 = vmatprep.subr.bf16.mxu0 0
        %2958 = vmatpush2.bf16.msra.mxu0 0
        %2959 = vmatprep.subr.bf16.mxu0 0
        %2960 = vmatpush2.bf16.msra.mxu0 0
        %2961 = vmatprep.subr.bf16.mxu0 0
        %2962 = vmatpush2.bf16.msra.mxu0 0
        %2963 = vmatprep.subr.bf16.mxu0 0
        %2964 = vmatpush2.bf16.msra.mxu0 0
        %2965 = vmatprep.subr.bf16.mxu0 0
        %2966 = vmatpush2.bf16.msra.mxu0 0
        %2967 = vmatprep.subr.bf16.mxu0 0
        %2968 = vmatpush2.bf16.msra.mxu0 0
        %2969 = vmatprep.subr.bf16.mxu0 0
        %2970 = vmatpush2.bf16.msra.mxu0 0
        %2971 = vmatprep.subr.bf16.mxu0 0
        %2972 = vmatpush2.bf16.msra.mxu0 0
        %2973 = vmatprep.mubr.bf16.mxu0 0
        %2974 = vmatmul.mubr.bf16.gmra.mxu0 %v2934
        %v2975 = vpop.f32.mrf.mxu0
        %v2976 = vadd.f32 %v2939, %v2975
        %v2977 = vpop.f32.mrf.mxu0
        %v2978 = vpop.f32.mrf.mxu0
        %v2979 = vpop.f32.mrf.mxu0
        %2980 = vdwg.mxu0
        %v2981 = vlaneseq
        %v2982 = vshrl.u32 %v2981, 7
        %v2983 = vmax.f32 %v2976, 0.0
        %v2984 = vsub.f32 0.0, %v2976
        %v2985 = vmul.f32 %v2984, 1.442695
        %v2986 = vpow.pop %v2985
        %v2987 = vadd.f32 %v2986, 1.0
        %v2988 = vrcp.pop %v2987
        %vm2989 = vcmp.eq.s32.totalorder %v2982, 0
        %v2990 = vsel %vm2989, %v2983, %v2988
        %2991 = vst [vmem:[%s512] sm:$0xf] %v2990
        %s2992 = sand.u32 %s379, 1
        %s2993 = scalar_lea.sflag [#allocation3], %s2992
        %s2994 = sand.u32 %s379, 1
        %s2995 = smul.addr %s2994, 4
        %s2996 = scalar_lea.vmem [#allocation2], %s2995
        // Predicated region
        $region85: #{tpu_custom_call.1} parent=83 // pred_check
          %p2997 = pneg %p389
        $region86: #{tpu_custom_call.1} parent=83 // pred_check_branch
          %2999 = sbr.rel (%p2997) target = $region88
        $region87: #{tpu_custom_call.1} parent=83 // pred_region
          %s3001 = ssub.s32 64, 64
          %3002 = vsyncadd %s2993, %s3001
          %s3003 = smul.addr %s30, 64
          %s3004 = scalar_lea.hbm %s16, %s3003
          %s3006 = sshll.u32 %s2996, 4
          %s3007 = int_to_ptr.vmem [resolvable:$true] %s3006
          %3009 = dma.vmem_to_hbm [thread:$0]  %s3007, 64, %s3004, %s2993
        $region88: #{tpu_custom_call.1} parent=83 // pred_fallthru
          _
      $region84: #{tpu_custom_call.1} parent=5 // pred_fallthru
        _
      %p3010 = scmp.le.s32.totalorder 2, %s25
      // Predicated region
      $region89: #{tpu_custom_call.1} parent=5 // pred_check
        %p3011 = pneg %p3010
      $region90: #{tpu_custom_call.1} parent=5 // pred_check_branch
        %3013 = sbr.rel (%p3011) target = $region92
      $region91: #{tpu_custom_call.1} parent=5 // pred_region
        %s3014 = ssub.s32 %s25, 2
        // Predicated region
        $region93: #{tpu_custom_call.1} parent=91 // pred_check
          %p3015 = pneg %p395
        $region94: #{tpu_custom_call.1} parent=91 // pred_check_branch
          %3017 = sbr.rel (%p3015) target = $region96
        $region95: #{tpu_custom_call.1} parent=91 // pred_region
          %s3018 = sand.u32 %s380, 1
          %s3019 = scalar_lea.sflag [#allocation3], %s3018
          %s3020 = sand.u32 %s380, 1
          %s3021 = smul.addr %s3020, 4
          %s3022 = scalar_lea.vmem [#allocation2], %s3021
          %3023 = dma.done %s3019, 64
        $region96: #{tpu_custom_call.1} parent=91 // pred_fallthru
          _
      $region92: #{tpu_custom_call.1} parent=5 // pred_fallthru
        _
    $region6: #{tpu_custom_call.1} parent=1 // loop_footer
      %s29 = sadd.s32 1, %s25
    $region7: #{tpu_custom_call.1} parent=1 // loop_footer_branch
      %24 = sbr.rel target = $region3
    $region8: #{tpu_custom_call.1} parent=1 // loop_exit
      _
    %3024 = vsyncpa [#allocation3], 1
    %s3025 = scalar_lea.sflag [#allocation3], 1
    %3026 = vsyncpa %s3025, 1

</llo_original>
